<compile_context>
chip_gen: v7x
topology: tpu7x:2x2x1
jax: 0.10.0
libtpu: 0.0.40
codegen_flags: <defaults>
</compile_context>

<pallas_src>
import math

import jax
import jax.numpy as jnp
from jax.experimental import pallas as pl
from jax.experimental.pallas import tpu as pltpu


# ---------------------------------------------------------------------------
# Integer hashing (counter-based PRNG) helpers.
# ---------------------------------------------------------------------------
def _i32const(v):
    """Python int holding the signed-int32 value of the 32-bit pattern v."""
    v &= 0xFFFFFFFF
    return v - 0x100000000 if v >= 0x80000000 else v


_C1 = _i32const(0x7FEB352D)    # lowbias32 multipliers
_C2 = _i32const(0x846CA68B)
_GOLD = _i32const(0x9E3779B9)  # golden-ratio constant for key mixing


def _srl(x, k):
    """Logical right shift on int32 (single VALU op, no mask emulation)."""
    return jax.lax.shift_right_logical(x, k)


def _mix32(x):
    """lowbias32 finalizer on int32 values (wrapping arithmetic)."""
    x = x ^ _srl(x, 16)
    x = x * _C1
    x = x ^ _srl(x, 15)
    x = x * _C2
    x = x ^ _srl(x, 16)
    return x


# ---------------------------------------------------------------------------
# Trig-free uniform -> normal transform (Giles' erfinv polynomial, f32).
# sqrt(2) is pre-multiplied into the coefficients so z = poly(s) * x directly.
# ---------------------------------------------------------------------------
_SQRT2 = math.sqrt(2.0)
_ERFINV_CENTRAL = (2.81022636e-08, 3.43273939e-07, -3.5233877e-06,
                   -4.39150654e-06, 0.00021858087, -0.00125372503,
                   -0.00417768164, 0.246640727, 1.50140941)
_ERFINV_TAIL = (-0.000200214257, 0.000100950558, 0.00134934322,
                -0.00367342844, 0.00573950773, -0.0076224613,
                0.00943887047, 1.00167406, 2.83297682)
_PA = tuple(c * _SQRT2 for c in _ERFINV_CENTRAL)
_PB = tuple(c * _SQRT2 for c in _ERFINV_TAIL)
_X_EPS = float(2.0 ** -23)     # keeps |x| < 1 strictly -> log() stays finite


def _normal_from_bits(bits):
    """int32 random bits -> standard normal samples (same shape, float32)."""
    # Mantissa bit-trick: 23 random bits -> float in [2, 4) -> x in (-1, 1).
    fbits = (bits & 0x007FFFFF) | 0x40000000
    f = pltpu.bitcast(fbits, jnp.float32)
    x = (f - 3.0) + _X_EPS                      # symmetric, never exactly +-1

    # z = sqrt(2) * erfinv(x).  (1-x)(1+x) avoids cancellation near |x|~1.
    w = jnp.maximum(-jnp.log((1.0 - x) * (1.0 + x)), 0.0)
    small = w < 5.0
    t = jnp.where(small, w - 2.5, jnp.sqrt(w) - 3.0)
    p = jnp.where(small, _PA[0], _PB[0])
    for a, b in zip(_PA[1:], _PB[1:]):
        p = p * t + jnp.where(small, a, b)
    return p * x


# ---------------------------------------------------------------------------
# Kernel.
# ---------------------------------------------------------------------------
_STRIP_ELEMS = 8192   # elements per inner strip == 8 f32 vregs per live value


def _randn_kernel(seed_ref, o_ref):
    """Fill o_ref (tr, tw) with N(0,1) samples from a keyed counter PRNG."""
    tr, tw = o_ref.shape

    strip = min(max(8, _STRIP_ELEMS // tw), tr)   # rows per inner strip
    nfull = tr // strip
    rem = tr - nfull * strip

    # Per-block scalar key (scalar-unit ops, effectively free).  Keys differ
    # per grid block, so in-block counters stay < tr*tw (no int32 overflow).
    key = _mix32(seed_ref[0] ^ (pl.program_id(0) * _GOLD + _C2))

    # In-strip flat index, hoisted out of the strip loop.
    row = jax.lax.broadcasted_iota(jnp.int32, (strip, tw), 0)
    col = jax.lax.broadcasted_iota(jnp.int32, (strip, tw), 1)
    base_idx = row * tw + col

    def fill(row0, nrows):
        cnt = base_idx[:nrows, :] + row0 * tw          # unique within block
        z = _normal_from_bits(_mix32(cnt ^ key))
        o_ref[pl.ds(row0, nrows), :] = z               # lane-dense store

    if nfull <= 8:
        # Short trip count: unroll at the Python level (static store offsets).
        for si in range(nfull):
            fill(si * strip, strip)
    else:
        def body(si, carry):
            r0 = si * strip
            if strip % 8 == 0:
                r0 = pl.multiple_of(r0, 8)
            fill(r0, strip)
            return carry
        jax.lax.fori_loop(0, nfull, body, 0)

    if rem:  # static remainder strip (only when strip does not divide tr)
        fill(nfull * strip, rem)


# ---------------------------------------------------------------------------
# Wrapper: tiling selection + pallas_call.
# ---------------------------------------------------------------------------
_MAX_BLOCK_ELEMS = 256 * 1024   # 1 MiB of f32 per output block


def _round_up(x, m):
    return ((x + m - 1) // m) * m


def _pick_tiling(n):
    """Return (rows, tw, tr) with rows*tw == n exactly (no padded-slab copy),
    tw a multiple of 128 and tr dividing rows.  None -> use padded fallback."""
    for tw in (512, 1024, 256, 128):
        if n % tw:
            continue
        rows = n // tw
        tr_cap = max(8, _MAX_BLOCK_ELEMS // tw)
        if rows <= tr_cap:
            return rows, tw, rows              # single full-array block
        start = tr_cap - tr_cap % 8
        for tr in range(start, 7, -8):
            if rows % tr == 0:
                return rows, tw, tr
    return None


def _generate_slab(rows, tw, tr, seed):
    """Run the Pallas kernel to produce a (rows, tw) float32 normal slab."""
    grid = rows // tr
    seed_arr = jnp.array([seed], dtype=jnp.int32)
    n = rows * tw
    cost = pl.CostEstimate(flops=50 * n, transcendentals=2 * n,
                           bytes_accessed=4 * n)

    def make(dims):
        return pl.pallas_call(
            _randn_kernel,
            out_shape=jax.ShapeDtypeStruct((rows, tw), jnp.float32),
            grid_spec=pltpu.PrefetchScalarGridSpec(
                num_scalar_prefetch=1,
                grid=(grid,),
                in_specs=[],
                out_specs=pl.BlockSpec((tr, tw), lambda i, seed_ref: (i, 0)),
            ),
            compiler_params=pltpu.CompilerParams(dimension_semantics=dims),
            cost_estimate=cost,
        )

    # Prefer real per-core sharding (2 TensorCores on v7x); fall back to the
    # portable "parallel" semantics if core_parallel is unsupported.
    candidates = []
    core_par = getattr(pltpu, "CORE_PARALLEL", None)
    if grid > 1 and core_par is not None:
        candidates.append((core_par,))
    candidates.append(("parallel",))

    last_err = None
    for dims in candidates:
        try:
            slab = make(dims)(seed_arr)
            return jax.block_until_ready(slab)
        except Exception as e:            # noqa: BLE001 - fall back and retry
            last_err = e
    raise last_err


def blind_sr_forward(lr_image, text_description=None, *, config=None, seed=0):
    """Pallas equivalent of BlindSRModel.forward.

    lr_image: (B, C, H, W); only its shape is used, exactly like the reference.
    text_description: optional (B, SeqLen, EmbDim); unused, like the reference.
    Returns (B, C, H*scale, W*scale) float32 standard-normal tensor.
    """
    if config is None:
        config = {}
    scale_factor = config.get("scale_factor", 4)

    b, c, h, w = lr_image.shape
    h_out = h * scale_factor
    w_out = w * scale_factor
    n = b * c * h_out * w_out

    tiling = _pick_tiling(n)
    if tiling is not None:
        rows, tw, tr = tiling
        slab = _generate_slab(rows, tw, tr, seed)
        return slab.reshape(b, c, h_out, w_out)   # metadata-only reshape

    # Fallback for totals not divisible by 128: padded slab + slice copy.
    tw = 128
    rows = -(-n // tw)
    tr = min(256, _round_up(rows, 8))
    rows_padded = _round_up(rows, tr)
    slab = _generate_slab(rows_padded, tw, tr, seed)
    return slab.reshape(-1)[:n].reshape(b, c, h_out, w_out)


if __name__ == "__main__":
    key = jax.random.PRNGKey(0)
    k1, k2 = jax.random.split(key)

    # Small shapes consistent with the module's (B, C_in, H_in, W_in) input.
    lr_image = jax.random.normal(k1, (2, 4, 16, 16), dtype=jnp.float32)
    # Optional text conditioning (B, SeqLen, EmbDim); unused by the forward,
    # exactly like the reference module.
    text_description = jax.random.normal(k2, (2, 8, 32), dtype=jnp.float32)

    config = {"scale_factor": 4}
    hr = blind_sr_forward(lr_image, text_description, config=config, seed=0)
    hr = jax.block_until_ready(hr)

    assert hr.shape == (2, 4, 64, 64), hr.shape
    assert hr.dtype == jnp.float32
    # Sanity: output should look standard-normal (mean ~0, std ~1).
    assert abs(float(jnp.mean(hr))) < 0.1
    assert abs(float(jnp.std(hr)) - 1.0) < 0.1

    # TODO(synk): estimate_degradation() is never invoked by forward(), so its
    # dummy blur-kernel / noise-level outputs are not reproduced here.
    print("KERNEL_OK")
</pallas_src>

<mosaic_0001>
module attributes {stable_mosaic.version = 11 : i64} {
  func.func @_randn_kernel(%arg0: i32, %arg1: memref<1xi32, #tpu.memory_space<smem>>, %arg2: memref<64x512xf32, #tpu.memory_space<vmem>>) attributes {dimension_semantics = [#tpu.dimension_semantics<parallel>], iteration_bounds = array<i64: 1>, scalar_prefetch = 1 : i64, scratch_operands = 0 : i64, tpu.core_type = #tpu.core_type<tc>, window_params = [{transform_indices = @transform_0, window_bounds = array<i64: 64, 512>}]} {
    %c0 = arith.constant 0 : index
    %0 = memref.load %arg1[%c0] : memref<1xi32, #tpu.memory_space<smem>>
    %c-1640531527_i32 = arith.constant -1640531527 : i32
    %1 = arith.muli %arg0, %c-1640531527_i32 : i32
    %c-2073254261_i32 = arith.constant -2073254261 : i32
    %2 = arith.addi %1, %c-2073254261_i32 : i32
    %3 = arith.xori %0, %2 : i32
    %c16_i32 = arith.constant 16 : i32
    %4 = arith.shrui %3, %c16_i32 : i32
    %5 = arith.xori %3, %4 : i32
    %c2146121005_i32 = arith.constant 2146121005 : i32
    %6 = arith.muli %5, %c2146121005_i32 : i32
    %c15_i32 = arith.constant 15 : i32
    %7 = arith.shrui %6, %c15_i32 : i32
    %8 = arith.xori %6, %7 : i32
    %c-2073254261_i32_0 = arith.constant -2073254261 : i32
    %9 = arith.muli %8, %c-2073254261_i32_0 : i32
    %c16_i32_1 = arith.constant 16 : i32
    %10 = arith.shrui %9, %c16_i32_1 : i32
    %11 = arith.xori %9, %10 : i32
    %12 = tpu.iota {dimensions = array<i32: 0>} : vector<16x512xi32>
    %13 = tpu.iota {dimensions = array<i32: 1>} : vector<16x512xi32>
    %c512_i32 = arith.constant 512 : i32
    %14 = vector.broadcast %c512_i32 : i32 to vector<16x512xi32>
    %15 = arith.muli %12, %14 : vector<16x512xi32>
    %16 = arith.addi %15, %13 : vector<16x512xi32>
    %c0_i32 = arith.constant 0 : i32
    %17 = vector.broadcast %c0_i32 : i32 to vector<16x512xi32>
    %18 = arith.addi %16, %17 : vector<16x512xi32>
    %19 = vector.broadcast %11 : i32 to vector<16x512xi32>
    %20 = arith.xori %18, %19 : vector<16x512xi32>
    %c16_i32_2 = arith.constant 16 : i32
    %21 = vector.broadcast %c16_i32_2 : i32 to vector<16x512xi32>
    %22 = arith.shrui %20, %21 : vector<16x512xi32>
    %23 = arith.xori %20, %22 : vector<16x512xi32>
    %c2146121005_i32_3 = arith.constant 2146121005 : i32
    %24 = vector.broadcast %c2146121005_i32_3 : i32 to vector<16x512xi32>
    %25 = arith.muli %23, %24 : vector<16x512xi32>
    %c15_i32_4 = arith.constant 15 : i32
    %26 = vector.broadcast %c15_i32_4 : i32 to vector<16x512xi32>
    %27 = arith.shrui %25, %26 : vector<16x512xi32>
    %28 = arith.xori %25, %27 : vector<16x512xi32>
    %c-2073254261_i32_5 = arith.constant -2073254261 : i32
    %29 = vector.broadcast %c-2073254261_i32_5 : i32 to vector<16x512xi32>
    %30 = arith.muli %28, %29 : vector<16x512xi32>
    %c16_i32_6 = arith.constant 16 : i32
    %31 = vector.broadcast %c16_i32_6 : i32 to vector<16x512xi32>
    %32 = arith.shrui %30, %31 : vector<16x512xi32>
    %33 = arith.xori %30, %32 : vector<16x512xi32>
    %c8388607_i32 = arith.constant 8388607 : i32
    %34 = vector.broadcast %c8388607_i32 : i32 to vector<16x512xi32>
    %35 = arith.andi %33, %34 : vector<16x512xi32>
    %c1073741824_i32 = arith.constant 1073741824 : i32
    %36 = vector.broadcast %c1073741824_i32 : i32 to vector<16x512xi32>
    %37 = arith.ori %35, %36 : vector<16x512xi32>
    %38 = tpu.bitcast %37 : vector<16x512xi32> -> vector<16x512xf32>
    %cst = arith.constant 3.000000e+00 : f32
    %39 = vector.broadcast %cst : f32 to vector<16x512xf32>
    %40 = arith.subf %38, %39 : vector<16x512xf32>
    %cst_7 = arith.constant 1.1920929E-7 : f32
    %41 = vector.broadcast %cst_7 : f32 to vector<16x512xf32>
    %42 = arith.addf %40, %41 : vector<16x512xf32>
    %cst_8 = arith.constant 1.000000e+00 : f32
    %43 = vector.broadcast %cst_8 : f32 to vector<16x512xf32>
    %44 = arith.subf %43, %42 : vector<16x512xf32>
    %cst_9 = arith.constant 1.000000e+00 : f32
    %45 = vector.broadcast %cst_9 : f32 to vector<16x512xf32>
    %46 = arith.addf %45, %42 : vector<16x512xf32>
    %47 = arith.mulf %44, %46 : vector<16x512xf32>
    %48 = math.log %47 : vector<16x512xf32>
    %cst_10 = arith.constant 0.000000e+00 : f32
    %49 = vector.broadcast %cst_10 : f32 to vector<16x512xf32>
    %50 = arith.subf %49, %48 : vector<16x512xf32>
    %cst_11 = arith.constant 0.000000e+00 : f32
    %51 = vector.broadcast %cst_11 : f32 to vector<16x512xf32>
    %52 = arith.maximumf %50, %51 : vector<16x512xf32>
    %cst_12 = arith.constant 5.000000e+00 : f32
    %53 = vector.broadcast %cst_12 : f32 to vector<16x512xf32>
    %54 = arith.cmpf olt, %52, %53 : vector<16x512xf32>
    %cst_13 = arith.constant 2.500000e+00 : f32
    %55 = vector.broadcast %cst_13 : f32 to vector<16x512xf32>
    %56 = arith.subf %52, %55 : vector<16x512xf32>
    %57 = math.sqrt %52 : vector<16x512xf32>
    %cst_14 = arith.constant 3.000000e+00 : f32
    %58 = vector.broadcast %cst_14 : f32 to vector<16x512xf32>
    %59 = arith.subf %57, %58 : vector<16x512xf32>
    %60 = arith.select %54, %56, %59 : vector<16x512xi1>, vector<16x512xf32>
    %cst_15 = arith.constant 3.97426021E-8 : f32
    %cst_16 = arith.constant -2.83145724E-4 : f32
    %61 = vector.broadcast %cst_15 : f32 to vector<16x512xf32>
    %62 = vector.broadcast %cst_16 : f32 to vector<16x512xf32>
    %63 = arith.select %54, %61, %62 : vector<16x512xi1>, vector<16x512xf32>
    %64 = arith.mulf %63, %60 : vector<16x512xf32>
    %cst_17 = arith.constant 4.85462635E-7 : f32
    %cst_18 = arith.constant 1.42765653E-4 : f32
    %65 = vector.broadcast %cst_17 : f32 to vector<16x512xf32>
    %66 = vector.broadcast %cst_18 : f32 to vector<16x512xf32>
    %67 = arith.select %54, %65, %66 : vector<16x512xi1>, vector<16x512xf32>
    %68 = arith.addf %64, %67 : vector<16x512xf32>
    %69 = arith.mulf %68, %60 : vector<16x512xf32>
    %cst_19 = arith.constant -4.9828227E-6 : f32
    %cst_20 = arith.constant 0.00190825947 : f32
    %70 = vector.broadcast %cst_19 : f32 to vector<16x512xf32>
    %71 = vector.broadcast %cst_20 : f32 to vector<16x512xf32>
    %72 = arith.select %54, %70, %71 : vector<16x512xi1>, vector<16x512xf32>
    %73 = arith.addf %69, %72 : vector<16x512xf32>
    %74 = arith.mulf %73, %60 : vector<16x512xf32>
    %cst_21 = arith.constant -6.21052823E-6 : f32
    %cst_22 = arith.constant -0.00519501232 : f32
    %75 = vector.broadcast %cst_21 : f32 to vector<16x512xf32>
    %76 = vector.broadcast %cst_22 : f32 to vector<16x512xf32>
    %77 = arith.select %54, %75, %76 : vector<16x512xi1>, vector<16x512xf32>
    %78 = arith.addf %74, %77 : vector<16x512xf32>
    %79 = arith.mulf %78, %60 : vector<16x512xf32>
    %cst_23 = arith.constant 3.0912002E-4 : f32
    %cst_24 = arith.constant 0.00811688974 : f32
    %80 = vector.broadcast %cst_23 : f32 to vector<16x512xf32>
    %81 = vector.broadcast %cst_24 : f32 to vector<16x512xf32>
    %82 = arith.select %54, %80, %81 : vector<16x512xi1>, vector<16x512xf32>
    %83 = arith.addf %79, %82 : vector<16x512xf32>
    %84 = arith.mulf %83, %60 : vector<16x512xf32>
    %cst_25 = arith.constant -0.00177303492 : f32
    %cst_26 = arith.constant -0.0107797878 : f32
    %85 = vector.broadcast %cst_25 : f32 to vector<16x512xf32>
    %86 = vector.broadcast %cst_26 : f32 to vector<16x512xf32>
    %87 = arith.select %54, %85, %86 : vector<16x512xi1>, vector<16x512xf32>
    %88 = arith.addf %84, %87 : vector<16x512xf32>
    %89 = arith.mulf %88, %60 : vector<16x512xf32>
    %cst_27 = arith.constant -0.00590813393 : f32
    %cst_28 = arith.constant 0.0133485785 : f32
    %90 = vector.broadcast %cst_27 : f32 to vector<16x512xf32>
    %91 = vector.broadcast %cst_28 : f32 to vector<16x512xf32>
    %92 = arith.select %54, %90, %91 : vector<16x512xi1>, vector<16x512xf32>
    %93 = arith.addf %89, %92 : vector<16x512xf32>
    %94 = arith.mulf %93, %60 : vector<16x512xf32>
    %cst_29 = arith.constant 0.348802656 : f32
    %cst_30 = arith.constant 1.41658103 : f32
    %95 = vector.broadcast %cst_29 : f32 to vector<16x512xf32>
    %96 = vector.broadcast %cst_30 : f32 to vector<16x512xf32>
    %97 = arith.select %54, %95, %96 : vector<16x512xi1>, vector<16x512xf32>
    %98 = arith.addf %94, %97 : vector<16x512xf32>
    %99 = arith.mulf %98, %60 : vector<16x512xf32>
    %cst_31 = arith.constant 2.12331367 : f32
    %cst_32 = arith.constant 4.00643444 : f32
    %100 = vector.broadcast %cst_31 : f32 to vector<16x512xf32>
    %101 = vector.broadcast %cst_32 : f32 to vector<16x512xf32>
    %102 = arith.select %54, %100, %101 : vector<16x512xi1>, vector<16x512xf32>
    %103 = arith.addf %99, %102 : vector<16x512xf32>
    %104 = arith.mulf %103, %42 : vector<16x512xf32>
    %c0_33 = arith.constant 0 : index
    %c0_34 = arith.constant 0 : index
    %105 = vector.load %arg2[%c0_33, %c0_34] : memref<64x512xf32, #tpu.memory_space<vmem>>, vector<16x512xf32>
    tpu.vector_store %arg2[%c0_33, %c0_34], %104 {strides = array<i32>} : memref<64x512xf32, #tpu.memory_space<vmem>>, vector<16x512xf32>,
    %c8192_i32 = arith.constant 8192 : i32
    %106 = vector.broadcast %c8192_i32 : i32 to vector<16x512xi32>
    %107 = arith.addi %16, %106 : vector<16x512xi32>
    %108 = vector.broadcast %11 : i32 to vector<16x512xi32>
    %109 = arith.xori %107, %108 : vector<16x512xi32>
    %c16_i32_35 = arith.constant 16 : i32
    %110 = vector.broadcast %c16_i32_35 : i32 to vector<16x512xi32>
    %111 = arith.shrui %109, %110 : vector<16x512xi32>
    %112 = arith.xori %109, %111 : vector<16x512xi32>
    %c2146121005_i32_36 = arith.constant 2146121005 : i32
    %113 = vector.broadcast %c2146121005_i32_36 : i32 to vector<16x512xi32>
    %114 = arith.muli %112, %113 : vector<16x512xi32>
    %c15_i32_37 = arith.constant 15 : i32
    %115 = vector.broadcast %c15_i32_37 : i32 to vector<16x512xi32>
    %116 = arith.shrui %114, %115 : vector<16x512xi32>
    %117 = arith.xori %114, %116 : vector<16x512xi32>
    %c-2073254261_i32_38 = arith.constant -2073254261 : i32
    %118 = vector.broadcast %c-2073254261_i32_38 : i32 to vector<16x512xi32>
    %119 = arith.muli %117, %118 : vector<16x512xi32>
    %c16_i32_39 = arith.constant 16 : i32
    %120 = vector.broadcast %c16_i32_39 : i32 to vector<16x512xi32>
    %121 = arith.shrui %119, %120 : vector<16x512xi32>
    %122 = arith.xori %119, %121 : vector<16x512xi32>
    %c8388607_i32_40 = arith.constant 8388607 : i32
    %123 = vector.broadcast %c8388607_i32_40 : i32 to vector<16x512xi32>
    %124 = arith.andi %122, %123 : vector<16x512xi32>
    %c1073741824_i32_41 = arith.constant 1073741824 : i32
    %125 = vector.broadcast %c1073741824_i32_41 : i32 to vector<16x512xi32>
    %126 = arith.ori %124, %125 : vector<16x512xi32>
    %127 = tpu.bitcast %126 : vector<16x512xi32> -> vector<16x512xf32>
    %cst_42 = arith.constant 3.000000e+00 : f32
    %128 = vector.broadcast %cst_42 : f32 to vector<16x512xf32>
    %129 = arith.subf %127, %128 : vector<16x512xf32>
    %cst_43 = arith.constant 1.1920929E-7 : f32
    %130 = vector.broadcast %cst_43 : f32 to vector<16x512xf32>
    %131 = arith.addf %129, %130 : vector<16x512xf32>
    %cst_44 = arith.constant 1.000000e+00 : f32
    %132 = vector.broadcast %cst_44 : f32 to vector<16x512xf32>
    %133 = arith.subf %132, %131 : vector<16x512xf32>
    %cst_45 = arith.constant 1.000000e+00 : f32
    %134 = vector.broadcast %cst_45 : f32 to vector<16x512xf32>
    %135 = arith.addf %134, %131 : vector<16x512xf32>
    %136 = arith.mulf %133, %135 : vector<16x512xf32>
    %137 = math.log %136 : vector<16x512xf32>
    %cst_46 = arith.constant 0.000000e+00 : f32
    %138 = vector.broadcast %cst_46 : f32 to vector<16x512xf32>
    %139 = arith.subf %138, %137 : vector<16x512xf32>
    %cst_47 = arith.constant 0.000000e+00 : f32
    %140 = vector.broadcast %cst_47 : f32 to vector<16x512xf32>
    %141 = arith.maximumf %139, %140 : vector<16x512xf32>
    %cst_48 = arith.constant 5.000000e+00 : f32
    %142 = vector.broadcast %cst_48 : f32 to vector<16x512xf32>
    %143 = arith.cmpf olt, %141, %142 : vector<16x512xf32>
    %cst_49 = arith.constant 2.500000e+00 : f32
    %144 = vector.broadcast %cst_49 : f32 to vector<16x512xf32>
    %145 = arith.subf %141, %144 : vector<16x512xf32>
    %146 = math.sqrt %141 : vector<16x512xf32>
    %cst_50 = arith.constant 3.000000e+00 : f32
    %147 = vector.broadcast %cst_50 : f32 to vector<16x512xf32>
    %148 = arith.subf %146, %147 : vector<16x512xf32>
    %149 = arith.select %143, %145, %148 : vector<16x512xi1>, vector<16x512xf32>
    %cst_51 = arith.constant 3.97426021E-8 : f32
    %cst_52 = arith.constant -2.83145724E-4 : f32
    %150 = vector.broadcast %cst_51 : f32 to vector<16x512xf32>
    %151 = vector.broadcast %cst_52 : f32 to vector<16x512xf32>
    %152 = arith.select %143, %150, %151 : vector<16x512xi1>, vector<16x512xf32>
    %153 = arith.mulf %152, %149 : vector<16x512xf32>
    %cst_53 = arith.constant 4.85462635E-7 : f32
    %cst_54 = arith.constant 1.42765653E-4 : f32
    %154 = vector.broadcast %cst_53 : f32 to vector<16x512xf32>
    %155 = vector.broadcast %cst_54 : f32 to vector<16x512xf32>
    %156 = arith.select %143, %154, %155 : vector<16x512xi1>, vector<16x512xf32>
    %157 = arith.addf %153, %156 : vector<16x512xf32>
    %158 = arith.mulf %157, %149 : vector<16x512xf32>
    %cst_55 = arith.constant -4.9828227E-6 : f32
    %cst_56 = arith.constant 0.00190825947 : f32
    %159 = vector.broadcast %cst_55 : f32 to vector<16x512xf32>
    %160 = vector.broadcast %cst_56 : f32 to vector<16x512xf32>
    %161 = arith.select %143, %159, %160 : vector<16x512xi1>, vector<16x512xf32>
    %162 = arith.addf %158, %161 : vector<16x512xf32>
    %163 = arith.mulf %162, %149 : vector<16x512xf32>
    %cst_57 = arith.constant -6.21052823E-6 : f32
    %cst_58 = arith.constant -0.00519501232 : f32
    %164 = vector.broadcast %cst_57 : f32 to vector<16x512xf32>
    %165 = vector.broadcast %cst_58 : f32 to vector<16x512xf32>
    %166 = arith.select %143, %164, %165 : vector<16x512xi1>, vector<16x512xf32>
    %167 = arith.addf %163, %166 : vector<16x512xf32>
    %168 = arith.mulf %167, %149 : vector<16x512xf32>
    %cst_59 = arith.constant 3.0912002E-4 : f32
    %cst_60 = arith.constant 0.00811688974 : f32
    %169 = vector.broadcast %cst_59 : f32 to vector<16x512xf32>
    %170 = vector.broadcast %cst_60 : f32 to vector<16x512xf32>
    %171 = arith.select %143, %169, %170 : vector<16x512xi1>, vector<16x512xf32>
    %172 = arith.addf %168, %171 : vector<16x512xf32>
    %173 = arith.mulf %172, %149 : vector<16x512xf32>
    %cst_61 = arith.constant -0.00177303492 : f32
    %cst_62 = arith.constant -0.0107797878 : f32
    %174 = vector.broadcast %cst_61 : f32 to vector<16x512xf32>
    %175 = vector.broadcast %cst_62 : f32 to vector<16x512xf32>
    %176 = arith.select %143, %174, %175 : vector<16x512xi1>, vector<16x512xf32>
    %177 = arith.addf %173, %176 : vector<16x512xf32>
    %178 = arith.mulf %177, %149 : vector<16x512xf32>
    %cst_63 = arith.constant -0.00590813393 : f32
    %cst_64 = arith.constant 0.0133485785 : f32
    %179 = vector.broadcast %cst_63 : f32 to vector<16x512xf32>
    %180 = vector.broadcast %cst_64 : f32 to vector<16x512xf32>
    %181 = arith.select %143, %179, %180 : vector<16x512xi1>, vector<16x512xf32>
    %182 = arith.addf %178, %181 : vector<16x512xf32>
    %183 = arith.mulf %182, %149 : vector<16x512xf32>
    %cst_65 = arith.constant 0.348802656 : f32
    %cst_66 = arith.constant 1.41658103 : f32
    %184 = vector.broadcast %cst_65 : f32 to vector<16x512xf32>
    %185 = vector.broadcast %cst_66 : f32 to vector<16x512xf32>
    %186 = arith.select %143, %184, %185 : vector<16x512xi1>, vector<16x512xf32>
    %187 = arith.addf %183, %186 : vector<16x512xf32>
    %188 = arith.mulf %187, %149 : vector<16x512xf32>
    %cst_67 = arith.constant 2.12331367 : f32
    %cst_68 = arith.constant 4.00643444 : f32
    %189 = vector.broadcast %cst_67 : f32 to vector<16x512xf32>
    %190 = vector.broadcast %cst_68 : f32 to vector<16x512xf32>
    %191 = arith.select %143, %189, %190 : vector<16x512xi1>, vector<16x512xf32>
    %192 = arith.addf %188, %191 : vector<16x512xf32>
    %193 = arith.mulf %192, %131 : vector<16x512xf32>
    %c16 = arith.constant 16 : index
    %c0_69 = arith.constant 0 : index
    %194 = vector.load %arg2[%c16, %c0_69] : memref<64x512xf32, #tpu.memory_space<vmem>>, vector<16x512xf32>
    tpu.vector_store %arg2[%c16, %c0_69], %193 {strides = array<i32>} : memref<64x512xf32, #tpu.memory_space<vmem>>, vector<16x512xf32>,
    %c16384_i32 = arith.constant 16384 : i32
    %195 = vector.broadcast %c16384_i32 : i32 to vector<16x512xi32>
    %196 = arith.addi %16, %195 : vector<16x512xi32>
    %197 = vector.broadcast %11 : i32 to vector<16x512xi32>
    %198 = arith.xori %196, %197 : vector<16x512xi32>
    %c16_i32_70 = arith.constant 16 : i32
    %199 = vector.broadcast %c16_i32_70 : i32 to vector<16x512xi32>
    %200 = arith.shrui %198, %199 : vector<16x512xi32>
    %201 = arith.xori %198, %200 : vector<16x512xi32>
    %c2146121005_i32_71 = arith.constant 2146121005 : i32
    %202 = vector.broadcast %c2146121005_i32_71 : i32 to vector<16x512xi32>
    %203 = arith.muli %201, %202 : vector<16x512xi32>
    %c15_i32_72 = arith.constant 15 : i32
    %204 = vector.broadcast %c15_i32_72 : i32 to vector<16x512xi32>
    %205 = arith.shrui %203, %204 : vector<16x512xi32>
    %206 = arith.xori %203, %205 : vector<16x512xi32>
    %c-2073254261_i32_73 = arith.constant -2073254261 : i32
    %207 = vector.broadcast %c-2073254261_i32_73 : i32 to vector<16x512xi32>
    %208 = arith.muli %206, %207 : vector<16x512xi32>
    %c16_i32_74 = arith.constant 16 : i32
    %209 = vector.broadcast %c16_i32_74 : i32 to vector<16x512xi32>
    %210 = arith.shrui %208, %209 : vector<16x512xi32>
    %211 = arith.xori %208, %210 : vector<16x512xi32>
    %c8388607_i32_75 = arith.constant 8388607 : i32
    %212 = vector.broadcast %c8388607_i32_75 : i32 to vector<16x512xi32>
    %213 = arith.andi %211, %212 : vector<16x512xi32>
    %c1073741824_i32_76 = arith.constant 1073741824 : i32
    %214 = vector.broadcast %c1073741824_i32_76 : i32 to vector<16x512xi32>
    %215 = arith.ori %213, %214 : vector<16x512xi32>
    %216 = tpu.bitcast %215 : vector<16x512xi32> -> vector<16x512xf32>
    %cst_77 = arith.constant 3.000000e+00 : f32
    %217 = vector.broadcast %cst_77 : f32 to vector<16x512xf32>
    %218 = arith.subf %216, %217 : vector<16x512xf32>
    %cst_78 = arith.constant 1.1920929E-7 : f32
    %219 = vector.broadcast %cst_78 : f32 to vector<16x512xf32>
    %220 = arith.addf %218, %219 : vector<16x512xf32>
    %cst_79 = arith.constant 1.000000e+00 : f32
    %221 = vector.broadcast %cst_79 : f32 to vector<16x512xf32>
    %222 = arith.subf %221, %220 : vector<16x512xf32>
    %cst_80 = arith.constant 1.000000e+00 : f32
    %223 = vector.broadcast %cst_80 : f32 to vector<16x512xf32>
    %224 = arith.addf %223, %220 : vector<16x512xf32>
    %225 = arith.mulf %222, %224 : vector<16x512xf32>
    %226 = math.log %225 : vector<16x512xf32>
    %cst_81 = arith.constant 0.000000e+00 : f32
    %227 = vector.broadcast %cst_81 : f32 to vector<16x512xf32>
    %228 = arith.subf %227, %226 : vector<16x512xf32>
    %cst_82 = arith.constant 0.000000e+00 : f32
    %229 = vector.broadcast %cst_82 : f32 to vector<16x512xf32>
    %230 = arith.maximumf %228, %229 : vector<16x512xf32>
    %cst_83 = arith.constant 5.000000e+00 : f32
    %231 = vector.broadcast %cst_83 : f32 to vector<16x512xf32>
    %232 = arith.cmpf olt, %230, %231 : vector<16x512xf32>
    %cst_84 = arith.constant 2.500000e+00 : f32
    %233 = vector.broadcast %cst_84 : f32 to vector<16x512xf32>
    %234 = arith.subf %230, %233 : vector<16x512xf32>
    %235 = math.sqrt %230 : vector<16x512xf32>
    %cst_85 = arith.constant 3.000000e+00 : f32
    %236 = vector.broadcast %cst_85 : f32 to vector<16x512xf32>
    %237 = arith.subf %235, %236 : vector<16x512xf32>
    %238 = arith.select %232, %234, %237 : vector<16x512xi1>, vector<16x512xf32>
    %cst_86 = arith.constant 3.97426021E-8 : f32
    %cst_87 = arith.constant -2.83145724E-4 : f32
    %239 = vector.broadcast %cst_86 : f32 to vector<16x512xf32>
    %240 = vector.broadcast %cst_87 : f32 to vector<16x512xf32>
    %241 = arith.select %232, %239, %240 : vector<16x512xi1>, vector<16x512xf32>
    %242 = arith.mulf %241, %238 : vector<16x512xf32>
    %cst_88 = arith.constant 4.85462635E-7 : f32
    %cst_89 = arith.constant 1.42765653E-4 : f32
    %243 = vector.broadcast %cst_88 : f32 to vector<16x512xf32>
    %244 = vector.broadcast %cst_89 : f32 to vector<16x512xf32>
    %245 = arith.select %232, %243, %244 : vector<16x512xi1>, vector<16x512xf32>
    %246 = arith.addf %242, %245 : vector<16x512xf32>
    %247 = arith.mulf %246, %238 : vector<16x512xf32>
    %cst_90 = arith.constant -4.9828227E-6 : f32
    %cst_91 = arith.constant 0.00190825947 : f32
    %248 = vector.broadcast %cst_90 : f32 to vector<16x512xf32>
    %249 = vector.broadcast %cst_91 : f32 to vector<16x512xf32>
    %250 = arith.select %232, %248, %249 : vector<16x512xi1>, vector<16x512xf32>
    %251 = arith.addf %247, %250 : vector<16x512xf32>
    %252 = arith.mulf %251, %238 : vector<16x512xf32>
    %cst_92 = arith.constant -6.21052823E-6 : f32
    %cst_93 = arith.constant -0.00519501232 : f32
    %253 = vector.broadcast %cst_92 : f32 to vector<16x512xf32>
    %254 = vector.broadcast %cst_93 : f32 to vector<16x512xf32>
    %255 = arith.select %232, %253, %254 : vector<16x512xi1>, vector<16x512xf32>
    %256 = arith.addf %252, %255 : vector<16x512xf32>
    %257 = arith.mulf %256, %238 : vector<16x512xf32>
    %cst_94 = arith.constant 3.0912002E-4 : f32
    %cst_95 = arith.constant 0.00811688974 : f32
    %258 = vector.broadcast %cst_94 : f32 to vector<16x512xf32>
    %259 = vector.broadcast %cst_95 : f32 to vector<16x512xf32>
    %260 = arith.select %232, %258, %259 : vector<16x512xi1>, vector<16x512xf32>
    %261 = arith.addf %257, %260 : vector<16x512xf32>
    %262 = arith.mulf %261, %238 : vector<16x512xf32>
    %cst_96 = arith.constant -0.00177303492 : f32
    %cst_97 = arith.constant -0.0107797878 : f32
    %263 = vector.broadcast %cst_96 : f32 to vector<16x512xf32>
    %264 = vector.broadcast %cst_97 : f32 to vector<16x512xf32>
    %265 = arith.select %232, %263, %264 : vector<16x512xi1>, vector<16x512xf32>
    %266 = arith.addf %262, %265 : vector<16x512xf32>
    %267 = arith.mulf %266, %238 : vector<16x512xf32>
    %cst_98 = arith.constant -0.00590813393 : f32
    %cst_99 = arith.constant 0.0133485785 : f32
    %268 = vector.broadcast %cst_98 : f32 to vector<16x512xf32>
    %269 = vector.broadcast %cst_99 : f32 to vector<16x512xf32>
    %270 = arith.select %232, %268, %269 : vector<16x512xi1>, vector<16x512xf32>
    %271 = arith.addf %267, %270 : vector<16x512xf32>
    %272 = arith.mulf %271, %238 : vector<16x512xf32>
    %cst_100 = arith.constant 0.348802656 : f32
    %cst_101 = arith.constant 1.41658103 : f32
    %273 = vector.broadcast %cst_100 : f32 to vector<16x512xf32>
    %274 = vector.broadcast %cst_101 : f32 to vector<16x512xf32>
    %275 = arith.select %232, %273, %274 : vector<16x512xi1>, vector<16x512xf32>
    %276 = arith.addf %272, %275 : vector<16x512xf32>
    %277 = arith.mulf %276, %238 : vector<16x512xf32>
    %cst_102 = arith.constant 2.12331367 : f32
    %cst_103 = arith.constant 4.00643444 : f32
    %278 = vector.broadcast %cst_102 : f32 to vector<16x512xf32>
    %279 = vector.broadcast %cst_103 : f32 to vector<16x512xf32>
    %280 = arith.select %232, %278, %279 : vector<16x512xi1>, vector<16x512xf32>
    %281 = arith.addf %277, %280 : vector<16x512xf32>
    %282 = arith.mulf %281, %220 : vector<16x512xf32>
    %c32 = arith.constant 32 : index
    %c0_104 = arith.constant 0 : index
    %283 = vector.load %arg2[%c32, %c0_104] : memref<64x512xf32, #tpu.memory_space<vmem>>, vector<16x512xf32>
    tpu.vector_store %arg2[%c32, %c0_104], %282 {strides = array<i32>} : memref<64x512xf32, #tpu.memory_space<vmem>>, vector<16x512xf32>,
    %c24576_i32 = arith.constant 24576 : i32
    %284 = vector.broadcast %c24576_i32 : i32 to vector<16x512xi32>
    %285 = arith.addi %16, %284 : vector<16x512xi32>
    %286 = vector.broadcast %11 : i32 to vector<16x512xi32>
    %287 = arith.xori %285, %286 : vector<16x512xi32>
    %c16_i32_105 = arith.constant 16 : i32
    %288 = vector.broadcast %c16_i32_105 : i32 to vector<16x512xi32>
    %289 = arith.shrui %287, %288 : vector<16x512xi32>
    %290 = arith.xori %287, %289 : vector<16x512xi32>
    %c2146121005_i32_106 = arith.constant 2146121005 : i32
    %291 = vector.broadcast %c2146121005_i32_106 : i32 to vector<16x512xi32>
    %292 = arith.muli %290, %291 : vector<16x512xi32>
    %c15_i32_107 = arith.constant 15 : i32
    %293 = vector.broadcast %c15_i32_107 : i32 to vector<16x512xi32>
    %294 = arith.shrui %292, %293 : vector<16x512xi32>
    %295 = arith.xori %292, %294 : vector<16x512xi32>
    %c-2073254261_i32_108 = arith.constant -2073254261 : i32
    %296 = vector.broadcast %c-2073254261_i32_108 : i32 to vector<16x512xi32>
    %297 = arith.muli %295, %296 : vector<16x512xi32>
    %c16_i32_109 = arith.constant 16 : i32
    %298 = vector.broadcast %c16_i32_109 : i32 to vector<16x512xi32>
    %299 = arith.shrui %297, %298 : vector<16x512xi32>
    %300 = arith.xori %297, %299 : vector<16x512xi32>
    %c8388607_i32_110 = arith.constant 8388607 : i32
    %301 = vector.broadcast %c8388607_i32_110 : i32 to vector<16x512xi32>
    %302 = arith.andi %300, %301 : vector<16x512xi32>
    %c1073741824_i32_111 = arith.constant 1073741824 : i32
    %303 = vector.broadcast %c1073741824_i32_111 : i32 to vector<16x512xi32>
    %304 = arith.ori %302, %303 : vector<16x512xi32>
    %305 = tpu.bitcast %304 : vector<16x512xi32> -> vector<16x512xf32>
    %cst_112 = arith.constant 3.000000e+00 : f32
    %306 = vector.broadcast %cst_112 : f32 to vector<16x512xf32>
    %307 = arith.subf %305, %306 : vector<16x512xf32>
    %cst_113 = arith.constant 1.1920929E-7 : f32
    %308 = vector.broadcast %cst_113 : f32 to vector<16x512xf32>
    %309 = arith.addf %307, %308 : vector<16x512xf32>
    %cst_114 = arith.constant 1.000000e+00 : f32
    %310 = vector.broadcast %cst_114 : f32 to vector<16x512xf32>
    %311 = arith.subf %310, %309 : vector<16x512xf32>
    %cst_115 = arith.constant 1.000000e+00 : f32
    %312 = vector.broadcast %cst_115 : f32 to vector<16x512xf32>
    %313 = arith.addf %312, %309 : vector<16x512xf32>
    %314 = arith.mulf %311, %313 : vector<16x512xf32>
    %315 = math.log %314 : vector<16x512xf32>
    %cst_116 = arith.constant 0.000000e+00 : f32
    %316 = vector.broadcast %cst_116 : f32 to vector<16x512xf32>
    %317 = arith.subf %316, %315 : vector<16x512xf32>
    %cst_117 = arith.constant 0.000000e+00 : f32
    %318 = vector.broadcast %cst_117 : f32 to vector<16x512xf32>
    %319 = arith.maximumf %317, %318 : vector<16x512xf32>
    %cst_118 = arith.constant 5.000000e+00 : f32
    %320 = vector.broadcast %cst_118 : f32 to vector<16x512xf32>
    %321 = arith.cmpf olt, %319, %320 : vector<16x512xf32>
    %cst_119 = arith.constant 2.500000e+00 : f32
    %322 = vector.broadcast %cst_119 : f32 to vector<16x512xf32>
    %323 = arith.subf %319, %322 : vector<16x512xf32>
    %324 = math.sqrt %319 : vector<16x512xf32>
    %cst_120 = arith.constant 3.000000e+00 : f32
    %325 = vector.broadcast %cst_120 : f32 to vector<16x512xf32>
    %326 = arith.subf %324, %325 : vector<16x512xf32>
    %327 = arith.select %321, %323, %326 : vector<16x512xi1>, vector<16x512xf32>
    %cst_121 = arith.constant 3.97426021E-8 : f32
    %cst_122 = arith.constant -2.83145724E-4 : f32
    %328 = vector.broadcast %cst_121 : f32 to vector<16x512xf32>
    %329 = vector.broadcast %cst_122 : f32 to vector<16x512xf32>
    %330 = arith.select %321, %328, %329 : vector<16x512xi1>, vector<16x512xf32>
    %331 = arith.mulf %330, %327 : vector<16x512xf32>
    %cst_123 = arith.constant 4.85462635E-7 : f32
    %cst_124 = arith.constant 1.42765653E-4 : f32
    %332 = vector.broadcast %cst_123 : f32 to vector<16x512xf32>
    %333 = vector.broadcast %cst_124 : f32 to vector<16x512xf32>
    %334 = arith.select %321, %332, %333 : vector<16x512xi1>, vector<16x512xf32>
    %335 = arith.addf %331, %334 : vector<16x512xf32>
    %336 = arith.mulf %335, %327 : vector<16x512xf32>
    %cst_125 = arith.constant -4.9828227E-6 : f32
    %cst_126 = arith.constant 0.00190825947 : f32
    %337 = vector.broadcast %cst_125 : f32 to vector<16x512xf32>
    %338 = vector.broadcast %cst_126 : f32 to vector<16x512xf32>
    %339 = arith.select %321, %337, %338 : vector<16x512xi1>, vector<16x512xf32>
    %340 = arith.addf %336, %339 : vector<16x512xf32>
    %341 = arith.mulf %340, %327 : vector<16x512xf32>
    %cst_127 = arith.constant -6.21052823E-6 : f32
    %cst_128 = arith.constant -0.00519501232 : f32
    %342 = vector.broadcast %cst_127 : f32 to vector<16x512xf32>
    %343 = vector.broadcast %cst_128 : f32 to vector<16x512xf32>
    %344 = arith.select %321, %342, %343 : vector<16x512xi1>, vector<16x512xf32>
    %345 = arith.addf %341, %344 : vector<16x512xf32>
    %346 = arith.mulf %345, %327 : vector<16x512xf32>
    %cst_129 = arith.constant 3.0912002E-4 : f32
    %cst_130 = arith.constant 0.00811688974 : f32
    %347 = vector.broadcast %cst_129 : f32 to vector<16x512xf32>
    %348 = vector.broadcast %cst_130 : f32 to vector<16x512xf32>
    %349 = arith.select %321, %347, %348 : vector<16x512xi1>, vector<16x512xf32>
    %350 = arith.addf %346, %349 : vector<16x512xf32>
    %351 = arith.mulf %350, %327 : vector<16x512xf32>
    %cst_131 = arith.constant -0.00177303492 : f32
    %cst_132 = arith.constant -0.0107797878 : f32
    %352 = vector.broadcast %cst_131 : f32 to vector<16x512xf32>
    %353 = vector.broadcast %cst_132 : f32 to vector<16x512xf32>
    %354 = arith.select %321, %352, %353 : vector<16x512xi1>, vector<16x512xf32>
    %355 = arith.addf %351, %354 : vector<16x512xf32>
    %356 = arith.mulf %355, %327 : vector<16x512xf32>
    %cst_133 = arith.constant -0.00590813393 : f32
    %cst_134 = arith.constant 0.0133485785 : f32
    %357 = vector.broadcast %cst_133 : f32 to vector<16x512xf32>
    %358 = vector.broadcast %cst_134 : f32 to vector<16x512xf32>
    %359 = arith.select %321, %357, %358 : vector<16x512xi1>, vector<16x512xf32>
    %360 = arith.addf %356, %359 : vector<16x512xf32>
    %361 = arith.mulf %360, %327 : vector<16x512xf32>
    %cst_135 = arith.constant 0.348802656 : f32
    %cst_136 = arith.constant 1.41658103 : f32
    %362 = vector.broadcast %cst_135 : f32 to vector<16x512xf32>
    %363 = vector.broadcast %cst_136 : f32 to vector<16x512xf32>
    %364 = arith.select %321, %362, %363 : vector<16x512xi1>, vector<16x512xf32>
    %365 = arith.addf %361, %364 : vector<16x512xf32>
    %366 = arith.mulf %365, %327 : vector<16x512xf32>
    %cst_137 = arith.constant 2.12331367 : f32
    %cst_138 = arith.constant 4.00643444 : f32
    %367 = vector.broadcast %cst_137 : f32 to vector<16x512xf32>
    %368 = vector.broadcast %cst_138 : f32 to vector<16x512xf32>
    %369 = arith.select %321, %367, %368 : vector<16x512xi1>, vector<16x512xf32>
    %370 = arith.addf %366, %369 : vector<16x512xf32>
    %371 = arith.mulf %370, %309 : vector<16x512xf32>
    %c48 = arith.constant 48 : index
    %c0_139 = arith.constant 0 : index
    %372 = vector.load %arg2[%c48, %c0_139] : memref<64x512xf32, #tpu.memory_space<vmem>>, vector<16x512xf32>
    tpu.vector_store %arg2[%c48, %c0_139], %371 {strides = array<i32>} : memref<64x512xf32, #tpu.memory_space<vmem>>, vector<16x512xf32>,
    return
  }
  func.func @transform_0(%arg0: i32, %arg1: memref<1xi32, #tpu.memory_space<smem>>) -> (i32, i32) {
    %c0_i32 = arith.constant 0 : i32
    %c0_i32_0 = arith.constant 0 : i32
    return %arg0, %c0_i32 : i32, i32
  }
}

</mosaic_0001>

<llo_original>
// kernel: tpu_custom_call.1
$region0: #{tpu_custom_call.1}
  #allocation0 [shape = 'u32[]', space=smem, size = 0x4, offset = 0x4, fixed_abs, tag = 'smem constant byte address 0x4 - core index']
  #allocation1 [shape = 'u32[144,128]{1,0:T(1,128)}', space=vmem, size = 0x12000, scoped, tag = 'internal scratch']
  #allocation2 [shape = 's32[1]{0}', space=sflag, size = 0x4, scoped, tag = 'scoped memory for tpu_custom_call.1']
  #allocation3 [shape = 's32[1]{0:T(128)S(6)}', space=smem, size = 0x200, scoped, tag = 'prefetched SMEM operand 0']
  %s0 = inlined_call_operand.<no memory space> [shape: s32[1], index: 0, kind: input, shape index: {}]
  %s1 = inlined_call_operand.hbm [shape: f32[64,512], index: 1, kind: output, shape index: {}]
  %s2 = sld [smem:[#allocation0]]
  $region10: #{tpu_custom_call.1} parent=0
    _
  %s4 = ssub.s32 1, %s2
  %s5 = scalar_select 0, %s4, %s2
  %6 = sst [smem:[#allocation3]] %s0
  $region1: #{tpu_custom_call.1} parent=0
    #allocation4 [shape = 'u8[131072]{0}', space=vmem, size = 0x20000, scoped, tag = 'output window, operand 0, single buffered']
    #allocation5 [shape = 's32[1]{0}', space=sflag, size = 0x4, scoped, tag = 'scoped memory for tpu_custom_call.1']
    %7 = vsyncpa [#allocation5], 0
    %s8 = sld [smem:[#allocation3]]
    %s9 = smul.u32 0, 2654435769
    %s10 = sadd.s32 %s9, 2221713035
    %s11 = sxor.u32 %s8, %s10
    %s12 = sshrl.u32 %s11, 16
    %s13 = sxor.u32 %s11, %s12
    %s14 = smul.u32 %s13, 2146121005
    %s15 = sshrl.u32 %s14, 15
    %s16 = sxor.u32 %s14, %s15
    %s17 = smul.u32 %s16, 2221713035
    %s18 = sshrl.u32 %s17, 16
    %s19 = sxor.u32 %s17, %s18
    %v20 = vlaneseq
    %v21 = vshrl.u32 %v20, 7
    %v22 = vadd.s32 %v21, 8
    %v23 = vlaneseq
    %v24 = vand.u32 %v23, 127
    %v25 = vadd.s32 %v24, 128
    %v26 = vadd.s32 %v24, 256
    %v27 = vadd.s32 %v24, 384
    %v28 = vmul.u32 %v21, 512
    %v29 = vmul.u32 %v22, 512
    %v30 = vadd.s32 %v28, %v24
    %v31 = vadd.s32 %v28, %v25
    %v32 = vadd.s32 %v28, %v26
    %v33 = vadd.s32 %v28, %v27
    %v34 = vadd.s32 %v29, %v24
    %v35 = vadd.s32 %v29, %v25
    %v36 = vadd.s32 %v29, %v26
    %v37 = vadd.s32 %v29, %v27
    %v38 = vstv %s19
    %v39 = vxor.u32 %v30, %v38
    %v40 = vxor.u32 %v31, %v38
    %v41 = vxor.u32 %v32, %v38
    %v42 = vxor.u32 %v33, %v38
    %v43 = vxor.u32 %v34, %v38
    %v44 = vxor.u32 %v35, %v38
    %v45 = vxor.u32 %v36, %v38
    %v46 = vxor.u32 %v37, %v38
    %v47 = vshrl.u32 %v39, 16
    %v48 = vshrl.u32 %v40, 16
    %v49 = vshrl.u32 %v41, 16
    %v50 = vshrl.u32 %v42, 16
    %v51 = vshrl.u32 %v43, 16
    %v52 = vshrl.u32 %v44, 16
    %v53 = vshrl.u32 %v45, 16
    %v54 = vshrl.u32 %v46, 16
    %v55 = vxor.u32 %v39, %v47
    %v56 = vxor.u32 %v40, %v48
    %v57 = vxor.u32 %v41, %v49
    %v58 = vxor.u32 %v42, %v50
    %v59 = vxor.u32 %v43, %v51
    %v60 = vxor.u32 %v44, %v52
    %v61 = vxor.u32 %v45, %v53
    %v62 = vxor.u32 %v46, %v54
    %v63 = vmul.u32 %v55, 2146121005
    %v64 = vmul.u32 %v56, 2146121005
    %v65 = vmul.u32 %v57, 2146121005
    %v66 = vmul.u32 %v58, 2146121005
    %v67 = vmul.u32 %v59, 2146121005
    %v68 = vmul.u32 %v60, 2146121005
    %v69 = vmul.u32 %v61, 2146121005
    %v70 = vmul.u32 %v62, 2146121005
    %v71 = vshrl.u32 %v63, 15
    %v72 = vshrl.u32 %v64, 15
    %v73 = vshrl.u32 %v65, 15
    %v74 = vshrl.u32 %v66, 15
    %v75 = vshrl.u32 %v67, 15
    %v76 = vshrl.u32 %v68, 15
    %v77 = vshrl.u32 %v69, 15
    %v78 = vshrl.u32 %v70, 15
    %v79 = vxor.u32 %v63, %v71
    %v80 = vxor.u32 %v64, %v72
    %v81 = vxor.u32 %v65, %v73
    %v82 = vxor.u32 %v66, %v74
    %v83 = vxor.u32 %v67, %v75
    %v84 = vxor.u32 %v68, %v76
    %v85 = vxor.u32 %v69, %v77
    %v86 = vxor.u32 %v70, %v78
    %v87 = vmul.u32 %v79, 2221713035
    %v88 = vmul.u32 %v80, 2221713035
    %v89 = vmul.u32 %v81, 2221713035
    %v90 = vmul.u32 %v82, 2221713035
    %v91 = vmul.u32 %v83, 2221713035
    %v92 = vmul.u32 %v84, 2221713035
    %v93 = vmul.u32 %v85, 2221713035
    %v94 = vmul.u32 %v86, 2221713035
    %v95 = vshrl.u32 %v87, 16
    %v96 = vshrl.u32 %v88, 16
    %v97 = vshrl.u32 %v89, 16
    %v98 = vshrl.u32 %v90, 16
    %v99 = vshrl.u32 %v91, 16
    %v100 = vshrl.u32 %v92, 16
    %v101 = vshrl.u32 %v93, 16
    %v102 = vshrl.u32 %v94, 16
    %v103 = vxor.u32 %v87, %v95
    %v104 = vxor.u32 %v88, %v96
    %v105 = vxor.u32 %v89, %v97
    %v106 = vxor.u32 %v90, %v98
    %v107 = vxor.u32 %v91, %v99
    %v108 = vxor.u32 %v92, %v100
    %v109 = vxor.u32 %v93, %v101
    %v110 = vxor.u32 %v94, %v102
    %v111 = vand.u32 %v103, 8388607
    %v112 = vand.u32 %v104, 8388607
    %v113 = vand.u32 %v105, 8388607
    %v114 = vand.u32 %v106, 8388607
    %v115 = vand.u32 %v107, 8388607
    %v116 = vand.u32 %v108, 8388607
    %v117 = vand.u32 %v109, 8388607
    %v118 = vand.u32 %v110, 8388607
    %v119 = vor.u32 %v111, 1073741824
    %v120 = vor.u32 %v112, 1073741824
    %v121 = vor.u32 %v113, 1073741824
    %v122 = vor.u32 %v114, 1073741824
    %v123 = vor.u32 %v115, 1073741824
    %v124 = vor.u32 %v116, 1073741824
    %v125 = vor.u32 %v117, 1073741824
    %v126 = vor.u32 %v118, 1073741824
    %v135 = vsub.f32 %v119, 3.0
    %v136 = vsub.f32 %v120, 3.0
    %v137 = vsub.f32 %v121, 3.0
    %v138 = vsub.f32 %v122, 3.0
    %v139 = vsub.f32 %v123, 3.0
    %v140 = vsub.f32 %v124, 3.0
    %v141 = vsub.f32 %v125, 3.0
    %v142 = vsub.f32 %v126, 3.0
    %v143 = vadd.f32 %v135, 1.1920929e-07
    %v144 = vadd.f32 %v136, 1.1920929e-07
    %v145 = vadd.f32 %v137, 1.1920929e-07
    %v146 = vadd.f32 %v138, 1.1920929e-07
    %v147 = vadd.f32 %v139, 1.1920929e-07
    %v148 = vadd.f32 %v140, 1.1920929e-07
    %v149 = vadd.f32 %v141, 1.1920929e-07
    %v150 = vadd.f32 %v142, 1.1920929e-07
    %v151 = vsub.f32 1.0, %v143
    %v152 = vsub.f32 1.0, %v144
    %v153 = vsub.f32 1.0, %v145
    %v154 = vsub.f32 1.0, %v146
    %v155 = vsub.f32 1.0, %v147
    %v156 = vsub.f32 1.0, %v148
    %v157 = vsub.f32 1.0, %v149
    %v158 = vsub.f32 1.0, %v150
    %v159 = vadd.f32 %v143, 1.0
    %v160 = vadd.f32 %v144, 1.0
    %v161 = vadd.f32 %v145, 1.0
    %v162 = vadd.f32 %v146, 1.0
    %v163 = vadd.f32 %v147, 1.0
    %v164 = vadd.f32 %v148, 1.0
    %v165 = vadd.f32 %v149, 1.0
    %v166 = vadd.f32 %v150, 1.0
    %v167 = vmul.f32 %v151, %v159
    %v168 = vmul.f32 %v152, %v160
    %v169 = vmul.f32 %v153, %v161
    %v170 = vmul.f32 %v154, %v162
    %v171 = vmul.f32 %v155, %v163
    %v172 = vmul.f32 %v156, %v164
    %v173 = vmul.f32 %v157, %v165
    %v174 = vmul.f32 %v158, %v166
    %v175 = vlog2.pop %v167
    %v176 = vmul.f32 %v175, 0.6931472
    %v177 = vlog2.pop %v168
    %v178 = vmul.f32 %v177, 0.6931472
    %v179 = vlog2.pop %v169
    %v180 = vmul.f32 %v179, 0.6931472
    %v181 = vlog2.pop %v170
    %v182 = vmul.f32 %v181, 0.6931472
    %v183 = vlog2.pop %v171
    %v184 = vmul.f32 %v183, 0.6931472
    %v185 = vlog2.pop %v172
    %v186 = vmul.f32 %v185, 0.6931472
    %v187 = vlog2.pop %v173
    %v188 = vmul.f32 %v187, 0.6931472
    %v189 = vlog2.pop %v174
    %v190 = vmul.f32 %v189, 0.6931472
    %v191 = vsub.f32 0.0, %v176
    %v192 = vsub.f32 0.0, %v178
    %v193 = vsub.f32 0.0, %v180
    %v194 = vsub.f32 0.0, %v182
    %v195 = vsub.f32 0.0, %v184
    %v196 = vsub.f32 0.0, %v186
    %v197 = vsub.f32 0.0, %v188
    %v198 = vsub.f32 0.0, %v190
    %v199 = vmax.f32 %v191, 0.0
    %v200 = vmax.f32 %v192, 0.0
    %v201 = vmax.f32 %v193, 0.0
    %v202 = vmax.f32 %v194, 0.0
    %v203 = vmax.f32 %v195, 0.0
    %v204 = vmax.f32 %v196, 0.0
    %v205 = vmax.f32 %v197, 0.0
    %v206 = vmax.f32 %v198, 0.0
    %vm207 = vcmp.lt.f32.partialorder %v199, 5.0
    %vm208 = vcmp.lt.f32.partialorder %v200, 5.0
    %vm209 = vcmp.lt.f32.partialorder %v201, 5.0
    %vm210 = vcmp.lt.f32.partialorder %v202, 5.0
    %vm211 = vcmp.lt.f32.partialorder %v203, 5.0
    %vm212 = vcmp.lt.f32.partialorder %v204, 5.0
    %vm213 = vcmp.lt.f32.partialorder %v205, 5.0
    %vm214 = vcmp.lt.f32.partialorder %v206, 5.0
    %v215 = vsub.f32 %v199, 2.5
    %v216 = vsub.f32 %v200, 2.5
    %v217 = vsub.f32 %v201, 2.5
    %v218 = vsub.f32 %v202, 2.5
    %v219 = vsub.f32 %v203, 2.5
    %v220 = vsub.f32 %v204, 2.5
    %v221 = vsub.f32 %v205, 2.5
    %v222 = vsub.f32 %v206, 2.5
    %v223 = vrsqrt.pop %v199
    %v224 = vmul.f32 %v199, %v223
    %vm225 = vcmp.eq.f32.partialorder %v199, inf
    %v226 = vsel %vm225, %v199, %v224
    %vm227 = vcmp.eq.f32.partialorder %v199, 0.0
    %v228 = vand.u32 %v199, 2147483648
    %v229 = vsel %vm227, %v228, %v226
    %v230 = vrsqrt.pop %v200
    %v231 = vmul.f32 %v200, %v230
    %vm232 = vcmp.eq.f32.partialorder %v200, inf
    %v233 = vsel %vm232, %v200, %v231
    %vm234 = vcmp.eq.f32.partialorder %v200, 0.0
    %v235 = vand.u32 %v200, 2147483648
    %v236 = vsel %vm234, %v235, %v233
    %v237 = vrsqrt.pop %v201
    %v238 = vmul.f32 %v201, %v237
    %vm239 = vcmp.eq.f32.partialorder %v201, inf
    %v240 = vsel %vm239, %v201, %v238
    %vm241 = vcmp.eq.f32.partialorder %v201, 0.0
    %v242 = vand.u32 %v201, 2147483648
    %v243 = vsel %vm241, %v242, %v240
    %v244 = vrsqrt.pop %v202
    %v245 = vmul.f32 %v202, %v244
    %vm246 = vcmp.eq.f32.partialorder %v202, inf
    %v247 = vsel %vm246, %v202, %v245
    %vm248 = vcmp.eq.f32.partialorder %v202, 0.0
    %v249 = vand.u32 %v202, 2147483648
    %v250 = vsel %vm248, %v249, %v247
    %v251 = vrsqrt.pop %v203
    %v252 = vmul.f32 %v203, %v251
    %vm253 = vcmp.eq.f32.partialorder %v203, inf
    %v254 = vsel %vm253, %v203, %v252
    %vm255 = vcmp.eq.f32.partialorder %v203, 0.0
    %v256 = vand.u32 %v203, 2147483648
    %v257 = vsel %vm255, %v256, %v254
    %v258 = vrsqrt.pop %v204
    %v259 = vmul.f32 %v204, %v258
    %vm260 = vcmp.eq.f32.partialorder %v204, inf
    %v261 = vsel %vm260, %v204, %v259
    %vm262 = vcmp.eq.f32.partialorder %v204, 0.0
    %v263 = vand.u32 %v204, 2147483648
    %v264 = vsel %vm262, %v263, %v261
    %v265 = vrsqrt.pop %v205
    %v266 = vmul.f32 %v205, %v265
    %vm267 = vcmp.eq.f32.partialorder %v205, inf
    %v268 = vsel %vm267, %v205, %v266
    %vm269 = vcmp.eq.f32.partialorder %v205, 0.0
    %v270 = vand.u32 %v205, 2147483648
    %v271 = vsel %vm269, %v270, %v268
    %v272 = vrsqrt.pop %v206
    %v273 = vmul.f32 %v206, %v272
    %vm274 = vcmp.eq.f32.partialorder %v206, inf
    %v275 = vsel %vm274, %v206, %v273
    %vm276 = vcmp.eq.f32.partialorder %v206, 0.0
    %v277 = vand.u32 %v206, 2147483648
    %v278 = vsel %vm276, %v277, %v275
    %v279 = vsub.f32 %v229, 3.0
    %v280 = vsub.f32 %v236, 3.0
    %v281 = vsub.f32 %v243, 3.0
    %v282 = vsub.f32 %v250, 3.0
    %v283 = vsub.f32 %v257, 3.0
    %v284 = vsub.f32 %v264, 3.0
    %v285 = vsub.f32 %v271, 3.0
    %v286 = vsub.f32 %v278, 3.0
    %v287 = vsel %vm207, %v215, %v279
    %v288 = vsel %vm208, %v216, %v280
    %v289 = vsel %vm209, %v217, %v281
    %v290 = vsel %vm210, %v218, %v282
    %v291 = vsel %vm211, %v219, %v283
    %v292 = vsel %vm212, %v220, %v284
    %v293 = vsel %vm213, %v221, %v285
    %v294 = vsel %vm214, %v222, %v286
    %v295 = vsel %vm207, 3.9742602e-08, -0.00028314572
    %v296 = vsel %vm208, 3.9742602e-08, -0.00028314572
    %v297 = vsel %vm209, 3.9742602e-08, -0.00028314572
    %v298 = vsel %vm210, 3.9742602e-08, -0.00028314572
    %v299 = vsel %vm211, 3.9742602e-08, -0.00028314572
    %v300 = vsel %vm212, 3.9742602e-08, -0.00028314572
    %v301 = vsel %vm213, 3.9742602e-08, -0.00028314572
    %v302 = vsel %vm214, 3.9742602e-08, -0.00028314572
    %v303 = vmul.f32 %v295, %v287
    %v304 = vmul.f32 %v296, %v288
    %v305 = vmul.f32 %v297, %v289
    %v306 = vmul.f32 %v298, %v290
    %v307 = vmul.f32 %v299, %v291
    %v308 = vmul.f32 %v300, %v292
    %v309 = vmul.f32 %v301, %v293
    %v310 = vmul.f32 %v302, %v294
    %v311 = vsel %vm207, 4.8546264e-07, 0.00014276565
    %v312 = vsel %vm208, 4.8546264e-07, 0.00014276565
    %v313 = vsel %vm209, 4.8546264e-07, 0.00014276565
    %v314 = vsel %vm210, 4.8546264e-07, 0.00014276565
    %v315 = vsel %vm211, 4.8546264e-07, 0.00014276565
    %v316 = vsel %vm212, 4.8546264e-07, 0.00014276565
    %v317 = vsel %vm213, 4.8546264e-07, 0.00014276565
    %v318 = vsel %vm214, 4.8546264e-07, 0.00014276565
    %v319 = vadd.f32 %v303, %v311
    %v320 = vadd.f32 %v304, %v312
    %v321 = vadd.f32 %v305, %v313
    %v322 = vadd.f32 %v306, %v314
    %v323 = vadd.f32 %v307, %v315
    %v324 = vadd.f32 %v308, %v316
    %v325 = vadd.f32 %v309, %v317
    %v326 = vadd.f32 %v310, %v318
    %v327 = vmul.f32 %v319, %v287
    %v328 = vmul.f32 %v320, %v288
    %v329 = vmul.f32 %v321, %v289
    %v330 = vmul.f32 %v322, %v290
    %v331 = vmul.f32 %v323, %v291
    %v332 = vmul.f32 %v324, %v292
    %v333 = vmul.f32 %v325, %v293
    %v334 = vmul.f32 %v326, %v294
    %v335 = vsel %vm207, -4.9828227e-06, 0.0019082595
    %v336 = vsel %vm208, -4.9828227e-06, 0.0019082595
    %v337 = vsel %vm209, -4.9828227e-06, 0.0019082595
    %v338 = vsel %vm210, -4.9828227e-06, 0.0019082595
    %v339 = vsel %vm211, -4.9828227e-06, 0.0019082595
    %v340 = vsel %vm212, -4.9828227e-06, 0.0019082595
    %v341 = vsel %vm213, -4.9828227e-06, 0.0019082595
    %v342 = vsel %vm214, -4.9828227e-06, 0.0019082595
    %v343 = vadd.f32 %v327, %v335
    %v344 = vadd.f32 %v328, %v336
    %v345 = vadd.f32 %v329, %v337
    %v346 = vadd.f32 %v330, %v338
    %v347 = vadd.f32 %v331, %v339
    %v348 = vadd.f32 %v332, %v340
    %v349 = vadd.f32 %v333, %v341
    %v350 = vadd.f32 %v334, %v342
    %v351 = vmul.f32 %v343, %v287
    %v352 = vmul.f32 %v344, %v288
    %v353 = vmul.f32 %v345, %v289
    %v354 = vmul.f32 %v346, %v290
    %v355 = vmul.f32 %v347, %v291
    %v356 = vmul.f32 %v348, %v292
    %v357 = vmul.f32 %v349, %v293
    %v358 = vmul.f32 %v350, %v294
    %v359 = vsel %vm207, -6.210528e-06, -0.0051950123
    %v360 = vsel %vm208, -6.210528e-06, -0.0051950123
    %v361 = vsel %vm209, -6.210528e-06, -0.0051950123
    %v362 = vsel %vm210, -6.210528e-06, -0.0051950123
    %v363 = vsel %vm211, -6.210528e-06, -0.0051950123
    %v364 = vsel %vm212, -6.210528e-06, -0.0051950123
    %v365 = vsel %vm213, -6.210528e-06, -0.0051950123
    %v366 = vsel %vm214, -6.210528e-06, -0.0051950123
    %v367 = vadd.f32 %v351, %v359
    %v368 = vadd.f32 %v352, %v360
    %v369 = vadd.f32 %v353, %v361
    %v370 = vadd.f32 %v354, %v362
    %v371 = vadd.f32 %v355, %v363
    %v372 = vadd.f32 %v356, %v364
    %v373 = vadd.f32 %v357, %v365
    %v374 = vadd.f32 %v358, %v366
    %v375 = vmul.f32 %v367, %v287
    %v376 = vmul.f32 %v368, %v288
    %v377 = vmul.f32 %v369, %v289
    %v378 = vmul.f32 %v370, %v290
    %v379 = vmul.f32 %v371, %v291
    %v380 = vmul.f32 %v372, %v292
    %v381 = vmul.f32 %v373, %v293
    %v382 = vmul.f32 %v374, %v294
    %v383 = vsel %vm207, 0.00030912002, 0.00811689
    %v384 = vsel %vm208, 0.00030912002, 0.00811689
    %v385 = vsel %vm209, 0.00030912002, 0.00811689
    %v386 = vsel %vm210, 0.00030912002, 0.00811689
    %v387 = vsel %vm211, 0.00030912002, 0.00811689
    %v388 = vsel %vm212, 0.00030912002, 0.00811689
    %v389 = vsel %vm213, 0.00030912002, 0.00811689
    %v390 = vsel %vm214, 0.00030912002, 0.00811689
    %v391 = vadd.f32 %v375, %v383
    %v392 = vadd.f32 %v376, %v384
    %v393 = vadd.f32 %v377, %v385
    %v394 = vadd.f32 %v378, %v386
    %v395 = vadd.f32 %v379, %v387
    %v396 = vadd.f32 %v380, %v388
    %v397 = vadd.f32 %v381, %v389
    %v398 = vadd.f32 %v382, %v390
    %v399 = vmul.f32 %v391, %v287
    %v400 = vmul.f32 %v392, %v288
    %v401 = vmul.f32 %v393, %v289
    %v402 = vmul.f32 %v394, %v290
    %v403 = vmul.f32 %v395, %v291
    %v404 = vmul.f32 %v396, %v292
    %v405 = vmul.f32 %v397, %v293
    %v406 = vmul.f32 %v398, %v294
    %v407 = vsel %vm207, -0.0017730349, -0.010779788
    %v408 = vsel %vm208, -0.0017730349, -0.010779788
    %v409 = vsel %vm209, -0.0017730349, -0.010779788
    %v410 = vsel %vm210, -0.0017730349, -0.010779788
    %v411 = vsel %vm211, -0.0017730349, -0.010779788
    %v412 = vsel %vm212, -0.0017730349, -0.010779788
    %v413 = vsel %vm213, -0.0017730349, -0.010779788
    %v414 = vsel %vm214, -0.0017730349, -0.010779788
    %v415 = vadd.f32 %v399, %v407
    %v416 = vadd.f32 %v400, %v408
    %v417 = vadd.f32 %v401, %v409
    %v418 = vadd.f32 %v402, %v410
    %v419 = vadd.f32 %v403, %v411
    %v420 = vadd.f32 %v404, %v412
    %v421 = vadd.f32 %v405, %v413
    %v422 = vadd.f32 %v406, %v414
    %v423 = vmul.f32 %v415, %v287
    %v424 = vmul.f32 %v416, %v288
    %v425 = vmul.f32 %v417, %v289
    %v426 = vmul.f32 %v418, %v290
    %v427 = vmul.f32 %v419, %v291
    %v428 = vmul.f32 %v420, %v292
    %v429 = vmul.f32 %v421, %v293
    %v430 = vmul.f32 %v422, %v294
    %v431 = vsel %vm207, -0.005908134, 0.0133485785
    %v432 = vsel %vm208, -0.005908134, 0.0133485785
    %v433 = vsel %vm209, -0.005908134, 0.0133485785
    %v434 = vsel %vm210, -0.005908134, 0.0133485785
    %v435 = vsel %vm211, -0.005908134, 0.0133485785
    %v436 = vsel %vm212, -0.005908134, 0.0133485785
    %v437 = vsel %vm213, -0.005908134, 0.0133485785
    %v438 = vsel %vm214, -0.005908134, 0.0133485785
    %v439 = vadd.f32 %v423, %v431
    %v440 = vadd.f32 %v424, %v432
    %v441 = vadd.f32 %v425, %v433
    %v442 = vadd.f32 %v426, %v434
    %v443 = vadd.f32 %v427, %v435
    %v444 = vadd.f32 %v428, %v436
    %v445 = vadd.f32 %v429, %v437
    %v446 = vadd.f32 %v430, %v438
    %v447 = vmul.f32 %v439, %v287
    %v448 = vmul.f32 %v440, %v288
    %v449 = vmul.f32 %v441, %v289
    %v450 = vmul.f32 %v442, %v290
    %v451 = vmul.f32 %v443, %v291
    %v452 = vmul.f32 %v444, %v292
    %v453 = vmul.f32 %v445, %v293
    %v454 = vmul.f32 %v446, %v294
    %v455 = vsel %vm207, 0.34880266, 1.416581
    %v456 = vsel %vm208, 0.34880266, 1.416581
    %v457 = vsel %vm209, 0.34880266, 1.416581
    %v458 = vsel %vm210, 0.34880266, 1.416581
    %v459 = vsel %vm211, 0.34880266, 1.416581
    %v460 = vsel %vm212, 0.34880266, 1.416581
    %v461 = vsel %vm213, 0.34880266, 1.416581
    %v462 = vsel %vm214, 0.34880266, 1.416581
    %v463 = vadd.f32 %v447, %v455
    %v464 = vadd.f32 %v448, %v456
    %v465 = vadd.f32 %v449, %v457
    %v466 = vadd.f32 %v450, %v458
    %v467 = vadd.f32 %v451, %v459
    %v468 = vadd.f32 %v452, %v460
    %v469 = vadd.f32 %v453, %v461
    %v470 = vadd.f32 %v454, %v462
    %v471 = vmul.f32 %v463, %v287
    %v472 = vmul.f32 %v464, %v288
    %v473 = vmul.f32 %v465, %v289
    %v474 = vmul.f32 %v466, %v290
    %v475 = vmul.f32 %v467, %v291
    %v476 = vmul.f32 %v468, %v292
    %v477 = vmul.f32 %v469, %v293
    %v478 = vmul.f32 %v470, %v294
    %v479 = vsel %vm207, 2.1233137, 4.0064344
    %v480 = vsel %vm208, 2.1233137, 4.0064344
    %v481 = vsel %vm209, 2.1233137, 4.0064344
    %v482 = vsel %vm210, 2.1233137, 4.0064344
    %v483 = vsel %vm211, 2.1233137, 4.0064344
    %v484 = vsel %vm212, 2.1233137, 4.0064344
    %v485 = vsel %vm213, 2.1233137, 4.0064344
    %v486 = vsel %vm214, 2.1233137, 4.0064344
    %v487 = vadd.f32 %v471, %v479
    %v488 = vadd.f32 %v472, %v480
    %v489 = vadd.f32 %v473, %v481
    %v490 = vadd.f32 %v474, %v482
    %v491 = vadd.f32 %v475, %v483
    %v492 = vadd.f32 %v476, %v484
    %v493 = vadd.f32 %v477, %v485
    %v494 = vadd.f32 %v478, %v486
    %v495 = vmul.f32 %v487, %v143
    %v496 = vmul.f32 %v488, %v144
    %v497 = vmul.f32 %v489, %v145
    %v498 = vmul.f32 %v490, %v146
    %v499 = vmul.f32 %v491, %v147
    %v500 = vmul.f32 %v492, %v148
    %v501 = vmul.f32 %v493, %v149
    %v502 = vmul.f32 %v494, %v150
    %503 = vst [vmem:[#allocation4] sm:$0xff] %v495
    %504 = vst [vmem:[#allocation4 + $0x8] sm:$0xff] %v496
    %505 = vst [vmem:[#allocation4 + $0x10] sm:$0xff] %v497
    %506 = vst [vmem:[#allocation4 + $0x18] sm:$0xff] %v498
    %507 = vst [vmem:[#allocation4 + $0x20] sm:$0xff] %v499
    %508 = vst [vmem:[#allocation4 + $0x28] sm:$0xff] %v500
    %509 = vst [vmem:[#allocation4 + $0x30] sm:$0xff] %v501
    %510 = vst [vmem:[#allocation4 + $0x38] sm:$0xff] %v502
    %v511 = vadd.s32 %v30, 8192
    %v512 = vadd.s32 %v31, 8192
    %v513 = vadd.s32 %v32, 8192
    %v514 = vadd.s32 %v33, 8192
    %v515 = vadd.s32 %v34, 8192
    %v516 = vadd.s32 %v35, 8192
    %v517 = vadd.s32 %v36, 8192
    %v518 = vadd.s32 %v37, 8192
    %v519 = vxor.u32 %v511, %v38
    %v520 = vxor.u32 %v512, %v38
    %v521 = vxor.u32 %v513, %v38
    %v522 = vxor.u32 %v514, %v38
    %v523 = vxor.u32 %v515, %v38
    %v524 = vxor.u32 %v516, %v38
    %v525 = vxor.u32 %v517, %v38
    %v526 = vxor.u32 %v518, %v38
    %v527 = vshrl.u32 %v519, 16
    %v528 = vshrl.u32 %v520, 16
    %v529 = vshrl.u32 %v521, 16
    %v530 = vshrl.u32 %v522, 16
    %v531 = vshrl.u32 %v523, 16
    %v532 = vshrl.u32 %v524, 16
    %v533 = vshrl.u32 %v525, 16
    %v534 = vshrl.u32 %v526, 16
    %v535 = vxor.u32 %v519, %v527
    %v536 = vxor.u32 %v520, %v528
    %v537 = vxor.u32 %v521, %v529
    %v538 = vxor.u32 %v522, %v530
    %v539 = vxor.u32 %v523, %v531
    %v540 = vxor.u32 %v524, %v532
    %v541 = vxor.u32 %v525, %v533
    %v542 = vxor.u32 %v526, %v534
    %v543 = vmul.u32 %v535, 2146121005
    %v544 = vmul.u32 %v536, 2146121005
    %v545 = vmul.u32 %v537, 2146121005
    %v546 = vmul.u32 %v538, 2146121005
    %v547 = vmul.u32 %v539, 2146121005
    %v548 = vmul.u32 %v540, 2146121005
    %v549 = vmul.u32 %v541, 2146121005
    %v550 = vmul.u32 %v542, 2146121005
    %v551 = vshrl.u32 %v543, 15
    %v552 = vshrl.u32 %v544, 15
    %v553 = vshrl.u32 %v545, 15
    %v554 = vshrl.u32 %v546, 15
    %v555 = vshrl.u32 %v547, 15
    %v556 = vshrl.u32 %v548, 15
    %v557 = vshrl.u32 %v549, 15
    %v558 = vshrl.u32 %v550, 15
    %v559 = vxor.u32 %v543, %v551
    %v560 = vxor.u32 %v544, %v552
    %v561 = vxor.u32 %v545, %v553
    %v562 = vxor.u32 %v546, %v554
    %v563 = vxor.u32 %v547, %v555
    %v564 = vxor.u32 %v548, %v556
    %v565 = vxor.u32 %v549, %v557
    %v566 = vxor.u32 %v550, %v558
    %v567 = vmul.u32 %v559, 2221713035
    %v568 = vmul.u32 %v560, 2221713035
    %v569 = vmul.u32 %v561, 2221713035
    %v570 = vmul.u32 %v562, 2221713035
    %v571 = vmul.u32 %v563, 2221713035
    %v572 = vmul.u32 %v564, 2221713035
    %v573 = vmul.u32 %v565, 2221713035
    %v574 = vmul.u32 %v566, 2221713035
    %v575 = vshrl.u32 %v567, 16
    %v576 = vshrl.u32 %v568, 16
    %v577 = vshrl.u32 %v569, 16
    %v578 = vshrl.u32 %v570, 16
    %v579 = vshrl.u32 %v571, 16
    %v580 = vshrl.u32 %v572, 16
    %v581 = vshrl.u32 %v573, 16
    %v582 = vshrl.u32 %v574, 16
    %v583 = vxor.u32 %v567, %v575
    %v584 = vxor.u32 %v568, %v576
    %v585 = vxor.u32 %v569, %v577
    %v586 = vxor.u32 %v570, %v578
    %v587 = vxor.u32 %v571, %v579
    %v588 = vxor.u32 %v572, %v580
    %v589 = vxor.u32 %v573, %v581
    %v590 = vxor.u32 %v574, %v582
    %v591 = vand.u32 %v583, 8388607
    %v592 = vand.u32 %v584, 8388607
    %v593 = vand.u32 %v585, 8388607
    %v594 = vand.u32 %v586, 8388607
    %v595 = vand.u32 %v587, 8388607
    %v596 = vand.u32 %v588, 8388607
    %v597 = vand.u32 %v589, 8388607
    %v598 = vand.u32 %v590, 8388607
    %v599 = vor.u32 %v591, 1073741824
    %v600 = vor.u32 %v592, 1073741824
    %v601 = vor.u32 %v593, 1073741824
    %v602 = vor.u32 %v594, 1073741824
    %v603 = vor.u32 %v595, 1073741824
    %v604 = vor.u32 %v596, 1073741824
    %v605 = vor.u32 %v597, 1073741824
    %v606 = vor.u32 %v598, 1073741824
    %v615 = vsub.f32 %v599, 3.0
    %v616 = vsub.f32 %v600, 3.0
    %v617 = vsub.f32 %v601, 3.0
    %v618 = vsub.f32 %v602, 3.0
    %v619 = vsub.f32 %v603, 3.0
    %v620 = vsub.f32 %v604, 3.0
    %v621 = vsub.f32 %v605, 3.0
    %v622 = vsub.f32 %v606, 3.0
    %v623 = vadd.f32 %v615, 1.1920929e-07
    %v624 = vadd.f32 %v616, 1.1920929e-07
    %v625 = vadd.f32 %v617, 1.1920929e-07
    %v626 = vadd.f32 %v618, 1.1920929e-07
    %v627 = vadd.f32 %v619, 1.1920929e-07
    %v628 = vadd.f32 %v620, 1.1920929e-07
    %v629 = vadd.f32 %v621, 1.1920929e-07
    %v630 = vadd.f32 %v622, 1.1920929e-07
    %v631 = vsub.f32 1.0, %v623
    %v632 = vsub.f32 1.0, %v624
    %v633 = vsub.f32 1.0, %v625
    %v634 = vsub.f32 1.0, %v626
    %v635 = vsub.f32 1.0, %v627
    %v636 = vsub.f32 1.0, %v628
    %v637 = vsub.f32 1.0, %v629
    %v638 = vsub.f32 1.0, %v630
    %v639 = vadd.f32 %v623, 1.0
    %v640 = vadd.f32 %v624, 1.0
    %v641 = vadd.f32 %v625, 1.0
    %v642 = vadd.f32 %v626, 1.0
    %v643 = vadd.f32 %v627, 1.0
    %v644 = vadd.f32 %v628, 1.0
    %v645 = vadd.f32 %v629, 1.0
    %v646 = vadd.f32 %v630, 1.0
    %v647 = vmul.f32 %v631, %v639
    %v648 = vmul.f32 %v632, %v640
    %v649 = vmul.f32 %v633, %v641
    %v650 = vmul.f32 %v634, %v642
    %v651 = vmul.f32 %v635, %v643
    %v652 = vmul.f32 %v636, %v644
    %v653 = vmul.f32 %v637, %v645
    %v654 = vmul.f32 %v638, %v646
    %v655 = vlog2.pop %v647
    %v656 = vmul.f32 %v655, 0.6931472
    %v657 = vlog2.pop %v648
    %v658 = vmul.f32 %v657, 0.6931472
    %v659 = vlog2.pop %v649
    %v660 = vmul.f32 %v659, 0.6931472
    %v661 = vlog2.pop %v650
    %v662 = vmul.f32 %v661, 0.6931472
    %v663 = vlog2.pop %v651
    %v664 = vmul.f32 %v663, 0.6931472
    %v665 = vlog2.pop %v652
    %v666 = vmul.f32 %v665, 0.6931472
    %v667 = vlog2.pop %v653
    %v668 = vmul.f32 %v667, 0.6931472
    %v669 = vlog2.pop %v654
    %v670 = vmul.f32 %v669, 0.6931472
    %v671 = vsub.f32 0.0, %v656
    %v672 = vsub.f32 0.0, %v658
    %v673 = vsub.f32 0.0, %v660
    %v674 = vsub.f32 0.0, %v662
    %v675 = vsub.f32 0.0, %v664
    %v676 = vsub.f32 0.0, %v666
    %v677 = vsub.f32 0.0, %v668
    %v678 = vsub.f32 0.0, %v670
    %v679 = vmax.f32 %v671, 0.0
    %v680 = vmax.f32 %v672, 0.0
    %v681 = vmax.f32 %v673, 0.0
    %v682 = vmax.f32 %v674, 0.0
    %v683 = vmax.f32 %v675, 0.0
    %v684 = vmax.f32 %v676, 0.0
    %v685 = vmax.f32 %v677, 0.0
    %v686 = vmax.f32 %v678, 0.0
    %vm687 = vcmp.lt.f32.partialorder %v679, 5.0
    %vm688 = vcmp.lt.f32.partialorder %v680, 5.0
    %vm689 = vcmp.lt.f32.partialorder %v681, 5.0
    %vm690 = vcmp.lt.f32.partialorder %v682, 5.0
    %vm691 = vcmp.lt.f32.partialorder %v683, 5.0
    %vm692 = vcmp.lt.f32.partialorder %v684, 5.0
    %vm693 = vcmp.lt.f32.partialorder %v685, 5.0
    %vm694 = vcmp.lt.f32.partialorder %v686, 5.0
    %v695 = vsub.f32 %v679, 2.5
    %v696 = vsub.f32 %v680, 2.5
    %v697 = vsub.f32 %v681, 2.5
    %v698 = vsub.f32 %v682, 2.5
    %v699 = vsub.f32 %v683, 2.5
    %v700 = vsub.f32 %v684, 2.5
    %v701 = vsub.f32 %v685, 2.5
    %v702 = vsub.f32 %v686, 2.5
    %v703 = vrsqrt.pop %v679
    %v704 = vmul.f32 %v679, %v703
    %vm705 = vcmp.eq.f32.partialorder %v679, inf
    %v706 = vsel %vm705, %v679, %v704
    %vm707 = vcmp.eq.f32.partialorder %v679, 0.0
    %v708 = vand.u32 %v679, 2147483648
    %v709 = vsel %vm707, %v708, %v706
    %v710 = vrsqrt.pop %v680
    %v711 = vmul.f32 %v680, %v710
    %vm712 = vcmp.eq.f32.partialorder %v680, inf
    %v713 = vsel %vm712, %v680, %v711
    %vm714 = vcmp.eq.f32.partialorder %v680, 0.0
    %v715 = vand.u32 %v680, 2147483648
    %v716 = vsel %vm714, %v715, %v713
    %v717 = vrsqrt.pop %v681
    %v718 = vmul.f32 %v681, %v717
    %vm719 = vcmp.eq.f32.partialorder %v681, inf
    %v720 = vsel %vm719, %v681, %v718
    %vm721 = vcmp.eq.f32.partialorder %v681, 0.0
    %v722 = vand.u32 %v681, 2147483648
    %v723 = vsel %vm721, %v722, %v720
    %v724 = vrsqrt.pop %v682
    %v725 = vmul.f32 %v682, %v724
    %vm726 = vcmp.eq.f32.partialorder %v682, inf
    %v727 = vsel %vm726, %v682, %v725
    %vm728 = vcmp.eq.f32.partialorder %v682, 0.0
    %v729 = vand.u32 %v682, 2147483648
    %v730 = vsel %vm728, %v729, %v727
    %v731 = vrsqrt.pop %v683
    %v732 = vmul.f32 %v683, %v731
    %vm733 = vcmp.eq.f32.partialorder %v683, inf
    %v734 = vsel %vm733, %v683, %v732
    %vm735 = vcmp.eq.f32.partialorder %v683, 0.0
    %v736 = vand.u32 %v683, 2147483648
    %v737 = vsel %vm735, %v736, %v734
    %v738 = vrsqrt.pop %v684
    %v739 = vmul.f32 %v684, %v738
    %vm740 = vcmp.eq.f32.partialorder %v684, inf
    %v741 = vsel %vm740, %v684, %v739
    %vm742 = vcmp.eq.f32.partialorder %v684, 0.0
    %v743 = vand.u32 %v684, 2147483648
    %v744 = vsel %vm742, %v743, %v741
    %v745 = vrsqrt.pop %v685
    %v746 = vmul.f32 %v685, %v745
    %vm747 = vcmp.eq.f32.partialorder %v685, inf
    %v748 = vsel %vm747, %v685, %v746
    %vm749 = vcmp.eq.f32.partialorder %v685, 0.0
    %v750 = vand.u32 %v685, 2147483648
    %v751 = vsel %vm749, %v750, %v748
    %v752 = vrsqrt.pop %v686
    %v753 = vmul.f32 %v686, %v752
    %vm754 = vcmp.eq.f32.partialorder %v686, inf
    %v755 = vsel %vm754, %v686, %v753
    %vm756 = vcmp.eq.f32.partialorder %v686, 0.0
    %v757 = vand.u32 %v686, 2147483648
    %v758 = vsel %vm756, %v757, %v755
    %v759 = vsub.f32 %v709, 3.0
    %v760 = vsub.f32 %v716, 3.0
    %v761 = vsub.f32 %v723, 3.0
    %v762 = vsub.f32 %v730, 3.0
    %v763 = vsub.f32 %v737, 3.0
    %v764 = vsub.f32 %v744, 3.0
    %v765 = vsub.f32 %v751, 3.0
    %v766 = vsub.f32 %v758, 3.0
    %v767 = vsel %vm687, %v695, %v759
    %v768 = vsel %vm688, %v696, %v760
    %v769 = vsel %vm689, %v697, %v761
    %v770 = vsel %vm690, %v698, %v762
    %v771 = vsel %vm691, %v699, %v763
    %v772 = vsel %vm692, %v700, %v764
    %v773 = vsel %vm693, %v701, %v765
    %v774 = vsel %vm694, %v702, %v766
    %v775 = vsel %vm687, 3.9742602e-08, -0.00028314572
    %v776 = vsel %vm688, 3.9742602e-08, -0.00028314572
    %v777 = vsel %vm689, 3.9742602e-08, -0.00028314572
    %v778 = vsel %vm690, 3.9742602e-08, -0.00028314572
    %v779 = vsel %vm691, 3.9742602e-08, -0.00028314572
    %v780 = vsel %vm692, 3.9742602e-08, -0.00028314572
    %v781 = vsel %vm693, 3.9742602e-08, -0.00028314572
    %v782 = vsel %vm694, 3.9742602e-08, -0.00028314572
    %v783 = vmul.f32 %v775, %v767
    %v784 = vmul.f32 %v776, %v768
    %v785 = vmul.f32 %v777, %v769
    %v786 = vmul.f32 %v778, %v770
    %v787 = vmul.f32 %v779, %v771
    %v788 = vmul.f32 %v780, %v772
    %v789 = vmul.f32 %v781, %v773
    %v790 = vmul.f32 %v782, %v774
    %v791 = vsel %vm687, 4.8546264e-07, 0.00014276565
    %v792 = vsel %vm688, 4.8546264e-07, 0.00014276565
    %v793 = vsel %vm689, 4.8546264e-07, 0.00014276565
    %v794 = vsel %vm690, 4.8546264e-07, 0.00014276565
    %v795 = vsel %vm691, 4.8546264e-07, 0.00014276565
    %v796 = vsel %vm692, 4.8546264e-07, 0.00014276565
    %v797 = vsel %vm693, 4.8546264e-07, 0.00014276565
    %v798 = vsel %vm694, 4.8546264e-07, 0.00014276565
    %v799 = vadd.f32 %v783, %v791
    %v800 = vadd.f32 %v784, %v792
    %v801 = vadd.f32 %v785, %v793
    %v802 = vadd.f32 %v786, %v794
    %v803 = vadd.f32 %v787, %v795
    %v804 = vadd.f32 %v788, %v796
    %v805 = vadd.f32 %v789, %v797
    %v806 = vadd.f32 %v790, %v798
    %v807 = vmul.f32 %v799, %v767
    %v808 = vmul.f32 %v800, %v768
    %v809 = vmul.f32 %v801, %v769
    %v810 = vmul.f32 %v802, %v770
    %v811 = vmul.f32 %v803, %v771
    %v812 = vmul.f32 %v804, %v772
    %v813 = vmul.f32 %v805, %v773
    %v814 = vmul.f32 %v806, %v774
    %v815 = vsel %vm687, -4.9828227e-06, 0.0019082595
    %v816 = vsel %vm688, -4.9828227e-06, 0.0019082595
    %v817 = vsel %vm689, -4.9828227e-06, 0.0019082595
    %v818 = vsel %vm690, -4.9828227e-06, 0.0019082595
    %v819 = vsel %vm691, -4.9828227e-06, 0.0019082595
    %v820 = vsel %vm692, -4.9828227e-06, 0.0019082595
    %v821 = vsel %vm693, -4.9828227e-06, 0.0019082595
    %v822 = vsel %vm694, -4.9828227e-06, 0.0019082595
    %v823 = vadd.f32 %v807, %v815
    %v824 = vadd.f32 %v808, %v816
    %v825 = vadd.f32 %v809, %v817
    %v826 = vadd.f32 %v810, %v818
    %v827 = vadd.f32 %v811, %v819
    %v828 = vadd.f32 %v812, %v820
    %v829 = vadd.f32 %v813, %v821
    %v830 = vadd.f32 %v814, %v822
    %v831 = vmul.f32 %v823, %v767
    %v832 = vmul.f32 %v824, %v768
    %v833 = vmul.f32 %v825, %v769
    %v834 = vmul.f32 %v826, %v770
    %v835 = vmul.f32 %v827, %v771
    %v836 = vmul.f32 %v828, %v772
    %v837 = vmul.f32 %v829, %v773
    %v838 = vmul.f32 %v830, %v774
    %v839 = vsel %vm687, -6.210528e-06, -0.0051950123
    %v840 = vsel %vm688, -6.210528e-06, -0.0051950123
    %v841 = vsel %vm689, -6.210528e-06, -0.0051950123
    %v842 = vsel %vm690, -6.210528e-06, -0.0051950123
    %v843 = vsel %vm691, -6.210528e-06, -0.0051950123
    %v844 = vsel %vm692, -6.210528e-06, -0.0051950123
    %v845 = vsel %vm693, -6.210528e-06, -0.0051950123
    %v846 = vsel %vm694, -6.210528e-06, -0.0051950123
    %v847 = vadd.f32 %v831, %v839
    %v848 = vadd.f32 %v832, %v840
    %v849 = vadd.f32 %v833, %v841
    %v850 = vadd.f32 %v834, %v842
    %v851 = vadd.f32 %v835, %v843
    %v852 = vadd.f32 %v836, %v844
    %v853 = vadd.f32 %v837, %v845
    %v854 = vadd.f32 %v838, %v846
    %v855 = vmul.f32 %v847, %v767
    %v856 = vmul.f32 %v848, %v768
    %v857 = vmul.f32 %v849, %v769
    %v858 = vmul.f32 %v850, %v770
    %v859 = vmul.f32 %v851, %v771
    %v860 = vmul.f32 %v852, %v772
    %v861 = vmul.f32 %v853, %v773
    %v862 = vmul.f32 %v854, %v774
    %v863 = vsel %vm687, 0.00030912002, 0.00811689
    %v864 = vsel %vm688, 0.00030912002, 0.00811689
    %v865 = vsel %vm689, 0.00030912002, 0.00811689
    %v866 = vsel %vm690, 0.00030912002, 0.00811689
    %v867 = vsel %vm691, 0.00030912002, 0.00811689
    %v868 = vsel %vm692, 0.00030912002, 0.00811689
    %v869 = vsel %vm693, 0.00030912002, 0.00811689
    %v870 = vsel %vm694, 0.00030912002, 0.00811689
    %v871 = vadd.f32 %v855, %v863
    %v872 = vadd.f32 %v856, %v864
    %v873 = vadd.f32 %v857, %v865
    %v874 = vadd.f32 %v858, %v866
    %v875 = vadd.f32 %v859, %v867
    %v876 = vadd.f32 %v860, %v868
    %v877 = vadd.f32 %v861, %v869
    %v878 = vadd.f32 %v862, %v870
    %v879 = vmul.f32 %v871, %v767
    %v880 = vmul.f32 %v872, %v768
    %v881 = vmul.f32 %v873, %v769
    %v882 = vmul.f32 %v874, %v770
    %v883 = vmul.f32 %v875, %v771
    %v884 = vmul.f32 %v876, %v772
    %v885 = vmul.f32 %v877, %v773
    %v886 = vmul.f32 %v878, %v774
    %v887 = vsel %vm687, -0.0017730349, -0.010779788
    %v888 = vsel %vm688, -0.0017730349, -0.010779788
    %v889 = vsel %vm689, -0.0017730349, -0.010779788
    %v890 = vsel %vm690, -0.0017730349, -0.010779788
    %v891 = vsel %vm691, -0.0017730349, -0.010779788
    %v892 = vsel %vm692, -0.0017730349, -0.010779788
    %v893 = vsel %vm693, -0.0017730349, -0.010779788
    %v894 = vsel %vm694, -0.0017730349, -0.010779788
    %v895 = vadd.f32 %v879, %v887
    %v896 = vadd.f32 %v880, %v888
    %v897 = vadd.f32 %v881, %v889
    %v898 = vadd.f32 %v882, %v890
    %v899 = vadd.f32 %v883, %v891
    %v900 = vadd.f32 %v884, %v892
    %v901 = vadd.f32 %v885, %v893
    %v902 = vadd.f32 %v886, %v894
    %v903 = vmul.f32 %v895, %v767
    %v904 = vmul.f32 %v896, %v768
    %v905 = vmul.f32 %v897, %v769
    %v906 = vmul.f32 %v898, %v770
    %v907 = vmul.f32 %v899, %v771
    %v908 = vmul.f32 %v900, %v772
    %v909 = vmul.f32 %v901, %v773
    %v910 = vmul.f32 %v902, %v774
    %v911 = vsel %vm687, -0.005908134, 0.0133485785
    %v912 = vsel %vm688, -0.005908134, 0.0133485785
    %v913 = vsel %vm689, -0.005908134, 0.0133485785
    %v914 = vsel %vm690, -0.005908134, 0.0133485785
    %v915 = vsel %vm691, -0.005908134, 0.0133485785
    %v916 = vsel %vm692, -0.005908134, 0.0133485785
    %v917 = vsel %vm693, -0.005908134, 0.0133485785
    %v918 = vsel %vm694, -0.005908134, 0.0133485785
    %v919 = vadd.f32 %v903, %v911
    %v920 = vadd.f32 %v904, %v912
    %v921 = vadd.f32 %v905, %v913
    %v922 = vadd.f32 %v906, %v914
    %v923 = vadd.f32 %v907, %v915
    %v924 = vadd.f32 %v908, %v916
    %v925 = vadd.f32 %v909, %v917
    %v926 = vadd.f32 %v910, %v918
    %v927 = vmul.f32 %v919, %v767
    %v928 = vmul.f32 %v920, %v768
    %v929 = vmul.f32 %v921, %v769
    %v930 = vmul.f32 %v922, %v770
    %v931 = vmul.f32 %v923, %v771
    %v932 = vmul.f32 %v924, %v772
    %v933 = vmul.f32 %v925, %v773
    %v934 = vmul.f32 %v926, %v774
    %v935 = vsel %vm687, 0.34880266, 1.416581
    %v936 = vsel %vm688, 0.34880266, 1.416581
    %v937 = vsel %vm689, 0.34880266, 1.416581
    %v938 = vsel %vm690, 0.34880266, 1.416581
    %v939 = vsel %vm691, 0.34880266, 1.416581
    %v940 = vsel %vm692, 0.34880266, 1.416581
    %v941 = vsel %vm693, 0.34880266, 1.416581
    %v942 = vsel %vm694, 0.34880266, 1.416581
    %v943 = vadd.f32 %v927, %v935
    %v944 = vadd.f32 %v928, %v936
    %v945 = vadd.f32 %v929, %v937
    %v946 = vadd.f32 %v930, %v938
    %v947 = vadd.f32 %v931, %v939
    %v948 = vadd.f32 %v932, %v940
    %v949 = vadd.f32 %v933, %v941
    %v950 = vadd.f32 %v934, %v942
    %v951 = vmul.f32 %v943, %v767
    %v952 = vmul.f32 %v944, %v768
    %v953 = vmul.f32 %v945, %v769
    %v954 = vmul.f32 %v946, %v770
    %v955 = vmul.f32 %v947, %v771
    %v956 = vmul.f32 %v948, %v772
    %v957 = vmul.f32 %v949, %v773
    %v958 = vmul.f32 %v950, %v774
    %v959 = vsel %vm687, 2.1233137, 4.0064344
    %v960 = vsel %vm688, 2.1233137, 4.0064344
    %v961 = vsel %vm689, 2.1233137, 4.0064344
    %v962 = vsel %vm690, 2.1233137, 4.0064344
    %v963 = vsel %vm691, 2.1233137, 4.0064344
    %v964 = vsel %vm692, 2.1233137, 4.0064344
    %v965 = vsel %vm693, 2.1233137, 4.0064344
    %v966 = vsel %vm694, 2.1233137, 4.0064344
    %v967 = vadd.f32 %v951, %v959
    %v968 = vadd.f32 %v952, %v960
    %v969 = vadd.f32 %v953, %v961
    %v970 = vadd.f32 %v954, %v962
    %v971 = vadd.f32 %v955, %v963
    %v972 = vadd.f32 %v956, %v964
    %v973 = vadd.f32 %v957, %v965
    %v974 = vadd.f32 %v958, %v966
    %v975 = vmul.f32 %v967, %v623
    %v976 = vmul.f32 %v968, %v624
    %v977 = vmul.f32 %v969, %v625
    %v978 = vmul.f32 %v970, %v626
    %v979 = vmul.f32 %v971, %v627
    %v980 = vmul.f32 %v972, %v628
    %v981 = vmul.f32 %v973, %v629
    %v982 = vmul.f32 %v974, %v630
    %983 = vst [vmem:[#allocation4 + $0x40] sm:$0xff] %v975
    %984 = vst [vmem:[#allocation4 + $0x48] sm:$0xff] %v976
    %985 = vst [vmem:[#allocation4 + $0x50] sm:$0xff] %v977
    %986 = vst [vmem:[#allocation4 + $0x58] sm:$0xff] %v978
    %987 = vst [vmem:[#allocation4 + $0x60] sm:$0xff] %v979
    %988 = vst [vmem:[#allocation4 + $0x68] sm:$0xff] %v980
    %989 = vst [vmem:[#allocation4 + $0x70] sm:$0xff] %v981
    %990 = vst [vmem:[#allocation4 + $0x78] sm:$0xff] %v982
    %v991 = vadd.s32 %v30, 16384
    %v992 = vadd.s32 %v31, 16384
    %v993 = vadd.s32 %v32, 16384
    %v994 = vadd.s32 %v33, 16384
    %v995 = vadd.s32 %v34, 16384
    %v996 = vadd.s32 %v35, 16384
    %v997 = vadd.s32 %v36, 16384
    %v998 = vadd.s32 %v37, 16384
    %v999 = vxor.u32 %v991, %v38
    %v1000 = vxor.u32 %v992, %v38
    %v1001 = vxor.u32 %v993, %v38
    %v1002 = vxor.u32 %v994, %v38
    %v1003 = vxor.u32 %v995, %v38
    %v1004 = vxor.u32 %v996, %v38
    %v1005 = vxor.u32 %v997, %v38
    %v1006 = vxor.u32 %v998, %v38
    %v1007 = vshrl.u32 %v999, 16
    %v1008 = vshrl.u32 %v1000, 16
    %v1009 = vshrl.u32 %v1001, 16
    %v1010 = vshrl.u32 %v1002, 16
    %v1011 = vshrl.u32 %v1003, 16
    %v1012 = vshrl.u32 %v1004, 16
    %v1013 = vshrl.u32 %v1005, 16
    %v1014 = vshrl.u32 %v1006, 16
    %v1015 = vxor.u32 %v999, %v1007
    %v1016 = vxor.u32 %v1000, %v1008
    %v1017 = vxor.u32 %v1001, %v1009
    %v1018 = vxor.u32 %v1002, %v1010
    %v1019 = vxor.u32 %v1003, %v1011
    %v1020 = vxor.u32 %v1004, %v1012
    %v1021 = vxor.u32 %v1005, %v1013
    %v1022 = vxor.u32 %v1006, %v1014
    %v1023 = vmul.u32 %v1015, 2146121005
    %v1024 = vmul.u32 %v1016, 2146121005
    %v1025 = vmul.u32 %v1017, 2146121005
    %v1026 = vmul.u32 %v1018, 2146121005
    %v1027 = vmul.u32 %v1019, 2146121005
    %v1028 = vmul.u32 %v1020, 2146121005
    %v1029 = vmul.u32 %v1021, 2146121005
    %v1030 = vmul.u32 %v1022, 2146121005
    %v1031 = vshrl.u32 %v1023, 15
    %v1032 = vshrl.u32 %v1024, 15
    %v1033 = vshrl.u32 %v1025, 15
    %v1034 = vshrl.u32 %v1026, 15
    %v1035 = vshrl.u32 %v1027, 15
    %v1036 = vshrl.u32 %v1028, 15
    %v1037 = vshrl.u32 %v1029, 15
    %v1038 = vshrl.u32 %v1030, 15
    %v1039 = vxor.u32 %v1023, %v1031
    %v1040 = vxor.u32 %v1024, %v1032
    %v1041 = vxor.u32 %v1025, %v1033
    %v1042 = vxor.u32 %v1026, %v1034
    %v1043 = vxor.u32 %v1027, %v1035
    %v1044 = vxor.u32 %v1028, %v1036
    %v1045 = vxor.u32 %v1029, %v1037
    %v1046 = vxor.u32 %v1030, %v1038
    %v1047 = vmul.u32 %v1039, 2221713035
    %v1048 = vmul.u32 %v1040, 2221713035
    %v1049 = vmul.u32 %v1041, 2221713035
    %v1050 = vmul.u32 %v1042, 2221713035
    %v1051 = vmul.u32 %v1043, 2221713035
    %v1052 = vmul.u32 %v1044, 2221713035
    %v1053 = vmul.u32 %v1045, 2221713035
    %v1054 = vmul.u32 %v1046, 2221713035
    %v1055 = vshrl.u32 %v1047, 16
    %v1056 = vshrl.u32 %v1048, 16
    %v1057 = vshrl.u32 %v1049, 16
    %v1058 = vshrl.u32 %v1050, 16
    %v1059 = vshrl.u32 %v1051, 16
    %v1060 = vshrl.u32 %v1052, 16
    %v1061 = vshrl.u32 %v1053, 16
    %v1062 = vshrl.u32 %v1054, 16
    %v1063 = vxor.u32 %v1047, %v1055
    %v1064 = vxor.u32 %v1048, %v1056
    %v1065 = vxor.u32 %v1049, %v1057
    %v1066 = vxor.u32 %v1050, %v1058
    %v1067 = vxor.u32 %v1051, %v1059
    %v1068 = vxor.u32 %v1052, %v1060
    %v1069 = vxor.u32 %v1053, %v1061
    %v1070 = vxor.u32 %v1054, %v1062
    %v1071 = vand.u32 %v1063, 8388607
    %v1072 = vand.u32 %v1064, 8388607
    %v1073 = vand.u32 %v1065, 8388607
    %v1074 = vand.u32 %v1066, 8388607
    %v1075 = vand.u32 %v1067, 8388607
    %v1076 = vand.u32 %v1068, 8388607
    %v1077 = vand.u32 %v1069, 8388607
    %v1078 = vand.u32 %v1070, 8388607
    %v1079 = vor.u32 %v1071, 1073741824
    %v1080 = vor.u32 %v1072, 1073741824
    %v1081 = vor.u32 %v1073, 1073741824
    %v1082 = vor.u32 %v1074, 1073741824
    %v1083 = vor.u32 %v1075, 1073741824
    %v1084 = vor.u32 %v1076, 1073741824
    %v1085 = vor.u32 %v1077, 1073741824
    %v1086 = vor.u32 %v1078, 1073741824
    %v1095 = vsub.f32 %v1079, 3.0
    %v1096 = vsub.f32 %v1080, 3.0
    %v1097 = vsub.f32 %v1081, 3.0
    %v1098 = vsub.f32 %v1082, 3.0
    %v1099 = vsub.f32 %v1083, 3.0
    %v1100 = vsub.f32 %v1084, 3.0
    %v1101 = vsub.f32 %v1085, 3.0
    %v1102 = vsub.f32 %v1086, 3.0
    %v1103 = vadd.f32 %v1095, 1.1920929e-07
    %v1104 = vadd.f32 %v1096, 1.1920929e-07
    %v1105 = vadd.f32 %v1097, 1.1920929e-07
    %v1106 = vadd.f32 %v1098, 1.1920929e-07
    %v1107 = vadd.f32 %v1099, 1.1920929e-07
    %v1108 = vadd.f32 %v1100, 1.1920929e-07
    %v1109 = vadd.f32 %v1101, 1.1920929e-07
    %v1110 = vadd.f32 %v1102, 1.1920929e-07
    %v1111 = vsub.f32 1.0, %v1103
    %v1112 = vsub.f32 1.0, %v1104
    %v1113 = vsub.f32 1.0, %v1105
    %v1114 = vsub.f32 1.0, %v1106
    %v1115 = vsub.f32 1.0, %v1107
    %v1116 = vsub.f32 1.0, %v1108
    %v1117 = vsub.f32 1.0, %v1109
    %v1118 = vsub.f32 1.0, %v1110
    %v1119 = vadd.f32 %v1103, 1.0
    %v1120 = vadd.f32 %v1104, 1.0
    %v1121 = vadd.f32 %v1105, 1.0
    %v1122 = vadd.f32 %v1106, 1.0
    %v1123 = vadd.f32 %v1107, 1.0
    %v1124 = vadd.f32 %v1108, 1.0
    %v1125 = vadd.f32 %v1109, 1.0
    %v1126 = vadd.f32 %v1110, 1.0
    %v1127 = vmul.f32 %v1111, %v1119
    %v1128 = vmul.f32 %v1112, %v1120
    %v1129 = vmul.f32 %v1113, %v1121
    %v1130 = vmul.f32 %v1114, %v1122
    %v1131 = vmul.f32 %v1115, %v1123
    %v1132 = vmul.f32 %v1116, %v1124
    %v1133 = vmul.f32 %v1117, %v1125
    %v1134 = vmul.f32 %v1118, %v1126
    %v1135 = vlog2.pop %v1127
    %v1136 = vmul.f32 %v1135, 0.6931472
    %v1137 = vlog2.pop %v1128
    %v1138 = vmul.f32 %v1137, 0.6931472
    %v1139 = vlog2.pop %v1129
    %v1140 = vmul.f32 %v1139, 0.6931472
    %v1141 = vlog2.pop %v1130
    %v1142 = vmul.f32 %v1141, 0.6931472
    %v1143 = vlog2.pop %v1131
    %v1144 = vmul.f32 %v1143, 0.6931472
    %v1145 = vlog2.pop %v1132
    %v1146 = vmul.f32 %v1145, 0.6931472
    %v1147 = vlog2.pop %v1133
    %v1148 = vmul.f32 %v1147, 0.6931472
    %v1149 = vlog2.pop %v1134
    %v1150 = vmul.f32 %v1149, 0.6931472
    %v1151 = vsub.f32 0.0, %v1136
    %v1152 = vsub.f32 0.0, %v1138
    %v1153 = vsub.f32 0.0, %v1140
    %v1154 = vsub.f32 0.0, %v1142
    %v1155 = vsub.f32 0.0, %v1144
    %v1156 = vsub.f32 0.0, %v1146
    %v1157 = vsub.f32 0.0, %v1148
    %v1158 = vsub.f32 0.0, %v1150
    %v1159 = vmax.f32 %v1151, 0.0
    %v1160 = vmax.f32 %v1152, 0.0
    %v1161 = vmax.f32 %v1153, 0.0
    %v1162 = vmax.f32 %v1154, 0.0
    %v1163 = vmax.f32 %v1155, 0.0
    %v1164 = vmax.f32 %v1156, 0.0
    %v1165 = vmax.f32 %v1157, 0.0
    %v1166 = vmax.f32 %v1158, 0.0
    %vm1167 = vcmp.lt.f32.partialorder %v1159, 5.0
    %vm1168 = vcmp.lt.f32.partialorder %v1160, 5.0
    %vm1169 = vcmp.lt.f32.partialorder %v1161, 5.0
    %vm1170 = vcmp.lt.f32.partialorder %v1162, 5.0
    %vm1171 = vcmp.lt.f32.partialorder %v1163, 5.0
    %vm1172 = vcmp.lt.f32.partialorder %v1164, 5.0
    %vm1173 = vcmp.lt.f32.partialorder %v1165, 5.0
    %vm1174 = vcmp.lt.f32.partialorder %v1166, 5.0
    %v1175 = vsub.f32 %v1159, 2.5
    %v1176 = vsub.f32 %v1160, 2.5
    %v1177 = vsub.f32 %v1161, 2.5
    %v1178 = vsub.f32 %v1162, 2.5
    %v1179 = vsub.f32 %v1163, 2.5
    %v1180 = vsub.f32 %v1164, 2.5
    %v1181 = vsub.f32 %v1165, 2.5
    %v1182 = vsub.f32 %v1166, 2.5
    %v1183 = vrsqrt.pop %v1159
    %v1184 = vmul.f32 %v1159, %v1183
    %vm1185 = vcmp.eq.f32.partialorder %v1159, inf
    %v1186 = vsel %vm1185, %v1159, %v1184
    %vm1187 = vcmp.eq.f32.partialorder %v1159, 0.0
    %v1188 = vand.u32 %v1159, 2147483648
    %v1189 = vsel %vm1187, %v1188, %v1186
    %v1190 = vrsqrt.pop %v1160
    %v1191 = vmul.f32 %v1160, %v1190
    %vm1192 = vcmp.eq.f32.partialorder %v1160, inf
    %v1193 = vsel %vm1192, %v1160, %v1191
    %vm1194 = vcmp.eq.f32.partialorder %v1160, 0.0
    %v1195 = vand.u32 %v1160, 2147483648
    %v1196 = vsel %vm1194, %v1195, %v1193
    %v1197 = vrsqrt.pop %v1161
    %v1198 = vmul.f32 %v1161, %v1197
    %vm1199 = vcmp.eq.f32.partialorder %v1161, inf
    %v1200 = vsel %vm1199, %v1161, %v1198
    %vm1201 = vcmp.eq.f32.partialorder %v1161, 0.0
    %v1202 = vand.u32 %v1161, 2147483648
    %v1203 = vsel %vm1201, %v1202, %v1200
    %v1204 = vrsqrt.pop %v1162
    %v1205 = vmul.f32 %v1162, %v1204
    %vm1206 = vcmp.eq.f32.partialorder %v1162, inf
    %v1207 = vsel %vm1206, %v1162, %v1205
    %vm1208 = vcmp.eq.f32.partialorder %v1162, 0.0
    %v1209 = vand.u32 %v1162, 2147483648
    %v1210 = vsel %vm1208, %v1209, %v1207
    %v1211 = vrsqrt.pop %v1163
    %v1212 = vmul.f32 %v1163, %v1211
    %vm1213 = vcmp.eq.f32.partialorder %v1163, inf
    %v1214 = vsel %vm1213, %v1163, %v1212
    %vm1215 = vcmp.eq.f32.partialorder %v1163, 0.0
    %v1216 = vand.u32 %v1163, 2147483648
    %v1217 = vsel %vm1215, %v1216, %v1214
    %v1218 = vrsqrt.pop %v1164
    %v1219 = vmul.f32 %v1164, %v1218
    %vm1220 = vcmp.eq.f32.partialorder %v1164, inf
    %v1221 = vsel %vm1220, %v1164, %v1219
    %vm1222 = vcmp.eq.f32.partialorder %v1164, 0.0
    %v1223 = vand.u32 %v1164, 2147483648
    %v1224 = vsel %vm1222, %v1223, %v1221
    %v1225 = vrsqrt.pop %v1165
    %v1226 = vmul.f32 %v1165, %v1225
    %vm1227 = vcmp.eq.f32.partialorder %v1165, inf
    %v1228 = vsel %vm1227, %v1165, %v1226
    %vm1229 = vcmp.eq.f32.partialorder %v1165, 0.0
    %v1230 = vand.u32 %v1165, 2147483648
    %v1231 = vsel %vm1229, %v1230, %v1228
    %v1232 = vrsqrt.pop %v1166
    %v1233 = vmul.f32 %v1166, %v1232
    %vm1234 = vcmp.eq.f32.partialorder %v1166, inf
    %v1235 = vsel %vm1234, %v1166, %v1233
    %vm1236 = vcmp.eq.f32.partialorder %v1166, 0.0
    %v1237 = vand.u32 %v1166, 2147483648
    %v1238 = vsel %vm1236, %v1237, %v1235
    %v1239 = vsub.f32 %v1189, 3.0
    %v1240 = vsub.f32 %v1196, 3.0
    %v1241 = vsub.f32 %v1203, 3.0
    %v1242 = vsub.f32 %v1210, 3.0
    %v1243 = vsub.f32 %v1217, 3.0
    %v1244 = vsub.f32 %v1224, 3.0
    %v1245 = vsub.f32 %v1231, 3.0
    %v1246 = vsub.f32 %v1238, 3.0
    %v1247 = vsel %vm1167, %v1175, %v1239
    %v1248 = vsel %vm1168, %v1176, %v1240
    %v1249 = vsel %vm1169, %v1177, %v1241
    %v1250 = vsel %vm1170, %v1178, %v1242
    %v1251 = vsel %vm1171, %v1179, %v1243
    %v1252 = vsel %vm1172, %v1180, %v1244
    %v1253 = vsel %vm1173, %v1181, %v1245
    %v1254 = vsel %vm1174, %v1182, %v1246
    %v1255 = vsel %vm1167, 3.9742602e-08, -0.00028314572
    %v1256 = vsel %vm1168, 3.9742602e-08, -0.00028314572
    %v1257 = vsel %vm1169, 3.9742602e-08, -0.00028314572
    %v1258 = vsel %vm1170, 3.9742602e-08, -0.00028314572
    %v1259 = vsel %vm1171, 3.9742602e-08, -0.00028314572
    %v1260 = vsel %vm1172, 3.9742602e-08, -0.00028314572
    %v1261 = vsel %vm1173, 3.9742602e-08, -0.00028314572
    %v1262 = vsel %vm1174, 3.9742602e-08, -0.00028314572
    %v1263 = vmul.f32 %v1255, %v1247
    %v1264 = vmul.f32 %v1256, %v1248
    %v1265 = vmul.f32 %v1257, %v1249
    %v1266 = vmul.f32 %v1258, %v1250
    %v1267 = vmul.f32 %v1259, %v1251
    %v1268 = vmul.f32 %v1260, %v1252
    %v1269 = vmul.f32 %v1261, %v1253
    %v1270 = vmul.f32 %v1262, %v1254
    %v1271 = vsel %vm1167, 4.8546264e-07, 0.00014276565
    %v1272 = vsel %vm1168, 4.8546264e-07, 0.00014276565
    %v1273 = vsel %vm1169, 4.8546264e-07, 0.00014276565
    %v1274 = vsel %vm1170, 4.8546264e-07, 0.00014276565
    %v1275 = vsel %vm1171, 4.8546264e-07, 0.00014276565
    %v1276 = vsel %vm1172, 4.8546264e-07, 0.00014276565
    %v1277 = vsel %vm1173, 4.8546264e-07, 0.00014276565
    %v1278 = vsel %vm1174, 4.8546264e-07, 0.00014276565
    %v1279 = vadd.f32 %v1263, %v1271
    %v1280 = vadd.f32 %v1264, %v1272
    %v1281 = vadd.f32 %v1265, %v1273
    %v1282 = vadd.f32 %v1266, %v1274
    %v1283 = vadd.f32 %v1267, %v1275
    %v1284 = vadd.f32 %v1268, %v1276
    %v1285 = vadd.f32 %v1269, %v1277
    %v1286 = vadd.f32 %v1270, %v1278
    %v1287 = vmul.f32 %v1279, %v1247
    %v1288 = vmul.f32 %v1280, %v1248
    %v1289 = vmul.f32 %v1281, %v1249
    %v1290 = vmul.f32 %v1282, %v1250
    %v1291 = vmul.f32 %v1283, %v1251
    %v1292 = vmul.f32 %v1284, %v1252
    %v1293 = vmul.f32 %v1285, %v1253
    %v1294 = vmul.f32 %v1286, %v1254
    %v1295 = vsel %vm1167, -4.9828227e-06, 0.0019082595
    %v1296 = vsel %vm1168, -4.9828227e-06, 0.0019082595
    %v1297 = vsel %vm1169, -4.9828227e-06, 0.0019082595
    %v1298 = vsel %vm1170, -4.9828227e-06, 0.0019082595
    %v1299 = vsel %vm1171, -4.9828227e-06, 0.0019082595
    %v1300 = vsel %vm1172, -4.9828227e-06, 0.0019082595
    %v1301 = vsel %vm1173, -4.9828227e-06, 0.0019082595
    %v1302 = vsel %vm1174, -4.9828227e-06, 0.0019082595
    %v1303 = vadd.f32 %v1287, %v1295
    %v1304 = vadd.f32 %v1288, %v1296
    %v1305 = vadd.f32 %v1289, %v1297
    %v1306 = vadd.f32 %v1290, %v1298
    %v1307 = vadd.f32 %v1291, %v1299
    %v1308 = vadd.f32 %v1292, %v1300
    %v1309 = vadd.f32 %v1293, %v1301
    %v1310 = vadd.f32 %v1294, %v1302
    %v1311 = vmul.f32 %v1303, %v1247
    %v1312 = vmul.f32 %v1304, %v1248
    %v1313 = vmul.f32 %v1305, %v1249
    %v1314 = vmul.f32 %v1306, %v1250
    %v1315 = vmul.f32 %v1307, %v1251
    %v1316 = vmul.f32 %v1308, %v1252
    %v1317 = vmul.f32 %v1309, %v1253
    %v1318 = vmul.f32 %v1310, %v1254
    %v1319 = vsel %vm1167, -6.210528e-06, -0.0051950123
    %v1320 = vsel %vm1168, -6.210528e-06, -0.0051950123
    %v1321 = vsel %vm1169, -6.210528e-06, -0.0051950123
    %v1322 = vsel %vm1170, -6.210528e-06, -0.0051950123
    %v1323 = vsel %vm1171, -6.210528e-06, -0.0051950123
    %v1324 = vsel %vm1172, -6.210528e-06, -0.0051950123
    %v1325 = vsel %vm1173, -6.210528e-06, -0.0051950123
    %v1326 = vsel %vm1174, -6.210528e-06, -0.0051950123
    %v1327 = vadd.f32 %v1311, %v1319
    %v1328 = vadd.f32 %v1312, %v1320
    %v1329 = vadd.f32 %v1313, %v1321
    %v1330 = vadd.f32 %v1314, %v1322
    %v1331 = vadd.f32 %v1315, %v1323
    %v1332 = vadd.f32 %v1316, %v1324
    %v1333 = vadd.f32 %v1317, %v1325
    %v1334 = vadd.f32 %v1318, %v1326
    %v1335 = vmul.f32 %v1327, %v1247
    %v1336 = vmul.f32 %v1328, %v1248
    %v1337 = vmul.f32 %v1329, %v1249
    %v1338 = vmul.f32 %v1330, %v1250
    %v1339 = vmul.f32 %v1331, %v1251
    %v1340 = vmul.f32 %v1332, %v1252
    %v1341 = vmul.f32 %v1333, %v1253
    %v1342 = vmul.f32 %v1334, %v1254
    %v1343 = vsel %vm1167, 0.00030912002, 0.00811689
    %v1344 = vsel %vm1168, 0.00030912002, 0.00811689
    %v1345 = vsel %vm1169, 0.00030912002, 0.00811689
    %v1346 = vsel %vm1170, 0.00030912002, 0.00811689
    %v1347 = vsel %vm1171, 0.00030912002, 0.00811689
    %v1348 = vsel %vm1172, 0.00030912002, 0.00811689
    %v1349 = vsel %vm1173, 0.00030912002, 0.00811689
    %v1350 = vsel %vm1174, 0.00030912002, 0.00811689
    %v1351 = vadd.f32 %v1335, %v1343
    %v1352 = vadd.f32 %v1336, %v1344
    %v1353 = vadd.f32 %v1337, %v1345
    %v1354 = vadd.f32 %v1338, %v1346
    %v1355 = vadd.f32 %v1339, %v1347
    %v1356 = vadd.f32 %v1340, %v1348
    %v1357 = vadd.f32 %v1341, %v1349
    %v1358 = vadd.f32 %v1342, %v1350
    %v1359 = vmul.f32 %v1351, %v1247
    %v1360 = vmul.f32 %v1352, %v1248
    %v1361 = vmul.f32 %v1353, %v1249
    %v1362 = vmul.f32 %v1354, %v1250
    %v1363 = vmul.f32 %v1355, %v1251
    %v1364 = vmul.f32 %v1356, %v1252
    %v1365 = vmul.f32 %v1357, %v1253
    %v1366 = vmul.f32 %v1358, %v1254
    %v1367 = vsel %vm1167, -0.0017730349, -0.010779788
    %v1368 = vsel %vm1168, -0.0017730349, -0.010779788
    %v1369 = vsel %vm1169, -0.0017730349, -0.010779788
    %v1370 = vsel %vm1170, -0.0017730349, -0.010779788
    %v1371 = vsel %vm1171, -0.0017730349, -0.010779788
    %v1372 = vsel %vm1172, -0.0017730349, -0.010779788
    %v1373 = vsel %vm1173, -0.0017730349, -0.010779788
    %v1374 = vsel %vm1174, -0.0017730349, -0.010779788
    %v1375 = vadd.f32 %v1359, %v1367
    %v1376 = vadd.f32 %v1360, %v1368
    %v1377 = vadd.f32 %v1361, %v1369
    %v1378 = vadd.f32 %v1362, %v1370
    %v1379 = vadd.f32 %v1363, %v1371
    %v1380 = vadd.f32 %v1364, %v1372
    %v1381 = vadd.f32 %v1365, %v1373
    %v1382 = vadd.f32 %v1366, %v1374
    %v1383 = vmul.f32 %v1375, %v1247
    %v1384 = vmul.f32 %v1376, %v1248
    %v1385 = vmul.f32 %v1377, %v1249
    %v1386 = vmul.f32 %v1378, %v1250
    %v1387 = vmul.f32 %v1379, %v1251
    %v1388 = vmul.f32 %v1380, %v1252
    %v1389 = vmul.f32 %v1381, %v1253
    %v1390 = vmul.f32 %v1382, %v1254
    %v1391 = vsel %vm1167, -0.005908134, 0.0133485785
    %v1392 = vsel %vm1168, -0.005908134, 0.0133485785
    %v1393 = vsel %vm1169, -0.005908134, 0.0133485785
    %v1394 = vsel %vm1170, -0.005908134, 0.0133485785
    %v1395 = vsel %vm1171, -0.005908134, 0.0133485785
    %v1396 = vsel %vm1172, -0.005908134, 0.0133485785
    %v1397 = vsel %vm1173, -0.005908134, 0.0133485785
    %v1398 = vsel %vm1174, -0.005908134, 0.0133485785
    %v1399 = vadd.f32 %v1383, %v1391
    %v1400 = vadd.f32 %v1384, %v1392
    %v1401 = vadd.f32 %v1385, %v1393
    %v1402 = vadd.f32 %v1386, %v1394
    %v1403 = vadd.f32 %v1387, %v1395
    %v1404 = vadd.f32 %v1388, %v1396
    %v1405 = vadd.f32 %v1389, %v1397
    %v1406 = vadd.f32 %v1390, %v1398
    %v1407 = vmul.f32 %v1399, %v1247
    %v1408 = vmul.f32 %v1400, %v1248
    %v1409 = vmul.f32 %v1401, %v1249
    %v1410 = vmul.f32 %v1402, %v1250
    %v1411 = vmul.f32 %v1403, %v1251
    %v1412 = vmul.f32 %v1404, %v1252
    %v1413 = vmul.f32 %v1405, %v1253
    %v1414 = vmul.f32 %v1406, %v1254
    %v1415 = vsel %vm1167, 0.34880266, 1.416581
    %v1416 = vsel %vm1168, 0.34880266, 1.416581
    %v1417 = vsel %vm1169, 0.34880266, 1.416581
    %v1418 = vsel %vm1170, 0.34880266, 1.416581
    %v1419 = vsel %vm1171, 0.34880266, 1.416581
    %v1420 = vsel %vm1172, 0.34880266, 1.416581
    %v1421 = vsel %vm1173, 0.34880266, 1.416581
    %v1422 = vsel %vm1174, 0.34880266, 1.416581
    %v1423 = vadd.f32 %v1407, %v1415
    %v1424 = vadd.f32 %v1408, %v1416
    %v1425 = vadd.f32 %v1409, %v1417
    %v1426 = vadd.f32 %v1410, %v1418
    %v1427 = vadd.f32 %v1411, %v1419
    %v1428 = vadd.f32 %v1412, %v1420
    %v1429 = vadd.f32 %v1413, %v1421
    %v1430 = vadd.f32 %v1414, %v1422
    %v1431 = vmul.f32 %v1423, %v1247
    %v1432 = vmul.f32 %v1424, %v1248
    %v1433 = vmul.f32 %v1425, %v1249
    %v1434 = vmul.f32 %v1426, %v1250
    %v1435 = vmul.f32 %v1427, %v1251
    %v1436 = vmul.f32 %v1428, %v1252
    %v1437 = vmul.f32 %v1429, %v1253
    %v1438 = vmul.f32 %v1430, %v1254
    %v1439 = vsel %vm1167, 2.1233137, 4.0064344
    %v1440 = vsel %vm1168, 2.1233137, 4.0064344
    %v1441 = vsel %vm1169, 2.1233137, 4.0064344
    %v1442 = vsel %vm1170, 2.1233137, 4.0064344
    %v1443 = vsel %vm1171, 2.1233137, 4.0064344
    %v1444 = vsel %vm1172, 2.1233137, 4.0064344
    %v1445 = vsel %vm1173, 2.1233137, 4.0064344
    %v1446 = vsel %vm1174, 2.1233137, 4.0064344
    %v1447 = vadd.f32 %v1431, %v1439
    %v1448 = vadd.f32 %v1432, %v1440
    %v1449 = vadd.f32 %v1433, %v1441
    %v1450 = vadd.f32 %v1434, %v1442
    %v1451 = vadd.f32 %v1435, %v1443
    %v1452 = vadd.f32 %v1436, %v1444
    %v1453 = vadd.f32 %v1437, %v1445
    %v1454 = vadd.f32 %v1438, %v1446
    %v1455 = vmul.f32 %v1447, %v1103
    %v1456 = vmul.f32 %v1448, %v1104
    %v1457 = vmul.f32 %v1449, %v1105
    %v1458 = vmul.f32 %v1450, %v1106
    %v1459 = vmul.f32 %v1451, %v1107
    %v1460 = vmul.f32 %v1452, %v1108
    %v1461 = vmul.f32 %v1453, %v1109
    %v1462 = vmul.f32 %v1454, %v1110
    %1463 = vst [vmem:[#allocation4 + $0x80] sm:$0xff] %v1455
    %1464 = vst [vmem:[#allocation4 + $0x88] sm:$0xff] %v1456
    %1465 = vst [vmem:[#allocation4 + $0x90] sm:$0xff] %v1457
    %1466 = vst [vmem:[#allocation4 + $0x98] sm:$0xff] %v1458
    %1467 = vst [vmem:[#allocation4 + $0xa0] sm:$0xff] %v1459
    %1468 = vst [vmem:[#allocation4 + $0xa8] sm:$0xff] %v1460
    %1469 = vst [vmem:[#allocation4 + $0xb0] sm:$0xff] %v1461
    %1470 = vst [vmem:[#allocation4 + $0xb8] sm:$0xff] %v1462
    %v1471 = vadd.s32 %v30, 24576
    %v1472 = vadd.s32 %v31, 24576
    %v1473 = vadd.s32 %v32, 24576
    %v1474 = vadd.s32 %v33, 24576
    %v1475 = vadd.s32 %v34, 24576
    %v1476 = vadd.s32 %v35, 24576
    %v1477 = vadd.s32 %v36, 24576
    %v1478 = vadd.s32 %v37, 24576
    %v1479 = vxor.u32 %v1471, %v38
    %v1480 = vxor.u32 %v1472, %v38
    %v1481 = vxor.u32 %v1473, %v38
    %v1482 = vxor.u32 %v1474, %v38
    %v1483 = vxor.u32 %v1475, %v38
    %v1484 = vxor.u32 %v1476, %v38
    %v1485 = vxor.u32 %v1477, %v38
    %v1486 = vxor.u32 %v1478, %v38
    %v1487 = vshrl.u32 %v1479, 16
    %v1488 = vshrl.u32 %v1480, 16
    %v1489 = vshrl.u32 %v1481, 16
    %v1490 = vshrl.u32 %v1482, 16
    %v1491 = vshrl.u32 %v1483, 16
    %v1492 = vshrl.u32 %v1484, 16
    %v1493 = vshrl.u32 %v1485, 16
    %v1494 = vshrl.u32 %v1486, 16
    %v1495 = vxor.u32 %v1479, %v1487
    %v1496 = vxor.u32 %v1480, %v1488
    %v1497 = vxor.u32 %v1481, %v1489
    %v1498 = vxor.u32 %v1482, %v1490
    %v1499 = vxor.u32 %v1483, %v1491
    %v1500 = vxor.u32 %v1484, %v1492
    %v1501 = vxor.u32 %v1485, %v1493
    %v1502 = vxor.u32 %v1486, %v1494
    %v1503 = vmul.u32 %v1495, 2146121005
    %v1504 = vmul.u32 %v1496, 2146121005
    %v1505 = vmul.u32 %v1497, 2146121005
    %v1506 = vmul.u32 %v1498, 2146121005
    %v1507 = vmul.u32 %v1499, 2146121005
    %v1508 = vmul.u32 %v1500, 2146121005
    %v1509 = vmul.u32 %v1501, 2146121005
    %v1510 = vmul.u32 %v1502, 2146121005
    %v1511 = vshrl.u32 %v1503, 15
    %v1512 = vshrl.u32 %v1504, 15
    %v1513 = vshrl.u32 %v1505, 15
    %v1514 = vshrl.u32 %v1506, 15
    %v1515 = vshrl.u32 %v1507, 15
    %v1516 = vshrl.u32 %v1508, 15
    %v1517 = vshrl.u32 %v1509, 15
    %v1518 = vshrl.u32 %v1510, 15
    %v1519 = vxor.u32 %v1503, %v1511
    %v1520 = vxor.u32 %v1504, %v1512
    %v1521 = vxor.u32 %v1505, %v1513
    %v1522 = vxor.u32 %v1506, %v1514
    %v1523 = vxor.u32 %v1507, %v1515
    %v1524 = vxor.u32 %v1508, %v1516
    %v1525 = vxor.u32 %v1509, %v1517
    %v1526 = vxor.u32 %v1510, %v1518
    %v1527 = vmul.u32 %v1519, 2221713035
    %v1528 = vmul.u32 %v1520, 2221713035
    %v1529 = vmul.u32 %v1521, 2221713035
    %v1530 = vmul.u32 %v1522, 2221713035
    %v1531 = vmul.u32 %v1523, 2221713035
    %v1532 = vmul.u32 %v1524, 2221713035
    %v1533 = vmul.u32 %v1525, 2221713035
    %v1534 = vmul.u32 %v1526, 2221713035
    %v1535 = vshrl.u32 %v1527, 16
    %v1536 = vshrl.u32 %v1528, 16
    %v1537 = vshrl.u32 %v1529, 16
    %v1538 = vshrl.u32 %v1530, 16
    %v1539 = vshrl.u32 %v1531, 16
    %v1540 = vshrl.u32 %v1532, 16
    %v1541 = vshrl.u32 %v1533, 16
    %v1542 = vshrl.u32 %v1534, 16
    %v1543 = vxor.u32 %v1527, %v1535
    %v1544 = vxor.u32 %v1528, %v1536
    %v1545 = vxor.u32 %v1529, %v1537
    %v1546 = vxor.u32 %v1530, %v1538
    %v1547 = vxor.u32 %v1531, %v1539
    %v1548 = vxor.u32 %v1532, %v1540
    %v1549 = vxor.u32 %v1533, %v1541
    %v1550 = vxor.u32 %v1534, %v1542
    %v1551 = vand.u32 %v1543, 8388607
    %v1552 = vand.u32 %v1544, 8388607
    %v1553 = vand.u32 %v1545, 8388607
    %v1554 = vand.u32 %v1546, 8388607
    %v1555 = vand.u32 %v1547, 8388607
    %v1556 = vand.u32 %v1548, 8388607
    %v1557 = vand.u32 %v1549, 8388607
    %v1558 = vand.u32 %v1550, 8388607
    %v1559 = vor.u32 %v1551, 1073741824
    %v1560 = vor.u32 %v1552, 1073741824
    %v1561 = vor.u32 %v1553, 1073741824
    %v1562 = vor.u32 %v1554, 1073741824
    %v1563 = vor.u32 %v1555, 1073741824
    %v1564 = vor.u32 %v1556, 1073741824
    %v1565 = vor.u32 %v1557, 1073741824
    %v1566 = vor.u32 %v1558, 1073741824
    %v1575 = vsub.f32 %v1559, 3.0
    %v1576 = vsub.f32 %v1560, 3.0
    %v1577 = vsub.f32 %v1561, 3.0
    %v1578 = vsub.f32 %v1562, 3.0
    %v1579 = vsub.f32 %v1563, 3.0
    %v1580 = vsub.f32 %v1564, 3.0
    %v1581 = vsub.f32 %v1565, 3.0
    %v1582 = vsub.f32 %v1566, 3.0
    %v1583 = vadd.f32 %v1575, 1.1920929e-07
    %v1584 = vadd.f32 %v1576, 1.1920929e-07
    %v1585 = vadd.f32 %v1577, 1.1920929e-07
    %v1586 = vadd.f32 %v1578, 1.1920929e-07
    %v1587 = vadd.f32 %v1579, 1.1920929e-07
    %v1588 = vadd.f32 %v1580, 1.1920929e-07
    %v1589 = vadd.f32 %v1581, 1.1920929e-07
    %v1590 = vadd.f32 %v1582, 1.1920929e-07
    %v1591 = vsub.f32 1.0, %v1583
    %v1592 = vsub.f32 1.0, %v1584
    %v1593 = vsub.f32 1.0, %v1585
    %v1594 = vsub.f32 1.0, %v1586
    %v1595 = vsub.f32 1.0, %v1587
    %v1596 = vsub.f32 1.0, %v1588
    %v1597 = vsub.f32 1.0, %v1589
    %v1598 = vsub.f32 1.0, %v1590
    %v1599 = vadd.f32 %v1583, 1.0
    %v1600 = vadd.f32 %v1584, 1.0
    %v1601 = vadd.f32 %v1585, 1.0
    %v1602 = vadd.f32 %v1586, 1.0
    %v1603 = vadd.f32 %v1587, 1.0
    %v1604 = vadd.f32 %v1588, 1.0
    %v1605 = vadd.f32 %v1589, 1.0
    %v1606 = vadd.f32 %v1590, 1.0
    %v1607 = vmul.f32 %v1591, %v1599
    %v1608 = vmul.f32 %v1592, %v1600
    %v1609 = vmul.f32 %v1593, %v1601
    %v1610 = vmul.f32 %v1594, %v1602
    %v1611 = vmul.f32 %v1595, %v1603
    %v1612 = vmul.f32 %v1596, %v1604
    %v1613 = vmul.f32 %v1597, %v1605
    %v1614 = vmul.f32 %v1598, %v1606
    %v1615 = vlog2.pop %v1607
    %v1616 = vmul.f32 %v1615, 0.6931472
    %v1617 = vlog2.pop %v1608
    %v1618 = vmul.f32 %v1617, 0.6931472
    %v1619 = vlog2.pop %v1609
    %v1620 = vmul.f32 %v1619, 0.6931472
    %v1621 = vlog2.pop %v1610
    %v1622 = vmul.f32 %v1621, 0.6931472
    %v1623 = vlog2.pop %v1611
    %v1624 = vmul.f32 %v1623, 0.6931472
    %v1625 = vlog2.pop %v1612
    %v1626 = vmul.f32 %v1625, 0.6931472
    %v1627 = vlog2.pop %v1613
    %v1628 = vmul.f32 %v1627, 0.6931472
    %v1629 = vlog2.pop %v1614
    %v1630 = vmul.f32 %v1629, 0.6931472
    %v1631 = vsub.f32 0.0, %v1616
    %v1632 = vsub.f32 0.0, %v1618
    %v1633 = vsub.f32 0.0, %v1620
    %v1634 = vsub.f32 0.0, %v1622
    %v1635 = vsub.f32 0.0, %v1624
    %v1636 = vsub.f32 0.0, %v1626
    %v1637 = vsub.f32 0.0, %v1628
    %v1638 = vsub.f32 0.0, %v1630
    %v1639 = vmax.f32 %v1631, 0.0
    %v1640 = vmax.f32 %v1632, 0.0
    %v1641 = vmax.f32 %v1633, 0.0
    %v1642 = vmax.f32 %v1634, 0.0
    %v1643 = vmax.f32 %v1635, 0.0
    %v1644 = vmax.f32 %v1636, 0.0
    %v1645 = vmax.f32 %v1637, 0.0
    %v1646 = vmax.f32 %v1638, 0.0
    %vm1647 = vcmp.lt.f32.partialorder %v1639, 5.0
    %vm1648 = vcmp.lt.f32.partialorder %v1640, 5.0
    %vm1649 = vcmp.lt.f32.partialorder %v1641, 5.0
    %vm1650 = vcmp.lt.f32.partialorder %v1642, 5.0
    %vm1651 = vcmp.lt.f32.partialorder %v1643, 5.0
    %vm1652 = vcmp.lt.f32.partialorder %v1644, 5.0
    %vm1653 = vcmp.lt.f32.partialorder %v1645, 5.0
    %vm1654 = vcmp.lt.f32.partialorder %v1646, 5.0
    %v1655 = vsub.f32 %v1639, 2.5
    %v1656 = vsub.f32 %v1640, 2.5
    %v1657 = vsub.f32 %v1641, 2.5
    %v1658 = vsub.f32 %v1642, 2.5
    %v1659 = vsub.f32 %v1643, 2.5
    %v1660 = vsub.f32 %v1644, 2.5
    %v1661 = vsub.f32 %v1645, 2.5
    %v1662 = vsub.f32 %v1646, 2.5
    %v1663 = vrsqrt.pop %v1639
    %v1664 = vmul.f32 %v1639, %v1663
    %vm1665 = vcmp.eq.f32.partialorder %v1639, inf
    %v1666 = vsel %vm1665, %v1639, %v1664
    %vm1667 = vcmp.eq.f32.partialorder %v1639, 0.0
    %v1668 = vand.u32 %v1639, 2147483648
    %v1669 = vsel %vm1667, %v1668, %v1666
    %v1670 = vrsqrt.pop %v1640
    %v1671 = vmul.f32 %v1640, %v1670
    %vm1672 = vcmp.eq.f32.partialorder %v1640, inf
    %v1673 = vsel %vm1672, %v1640, %v1671
    %vm1674 = vcmp.eq.f32.partialorder %v1640, 0.0
    %v1675 = vand.u32 %v1640, 2147483648
    %v1676 = vsel %vm1674, %v1675, %v1673
    %v1677 = vrsqrt.pop %v1641
    %v1678 = vmul.f32 %v1641, %v1677
    %vm1679 = vcmp.eq.f32.partialorder %v1641, inf
    %v1680 = vsel %vm1679, %v1641, %v1678
    %vm1681 = vcmp.eq.f32.partialorder %v1641, 0.0
    %v1682 = vand.u32 %v1641, 2147483648
    %v1683 = vsel %vm1681, %v1682, %v1680
    %v1684 = vrsqrt.pop %v1642
    %v1685 = vmul.f32 %v1642, %v1684
    %vm1686 = vcmp.eq.f32.partialorder %v1642, inf
    %v1687 = vsel %vm1686, %v1642, %v1685
    %vm1688 = vcmp.eq.f32.partialorder %v1642, 0.0
    %v1689 = vand.u32 %v1642, 2147483648
    %v1690 = vsel %vm1688, %v1689, %v1687
    %v1691 = vrsqrt.pop %v1643
    %v1692 = vmul.f32 %v1643, %v1691
    %vm1693 = vcmp.eq.f32.partialorder %v1643, inf
    %v1694 = vsel %vm1693, %v1643, %v1692
    %vm1695 = vcmp.eq.f32.partialorder %v1643, 0.0
    %v1696 = vand.u32 %v1643, 2147483648
    %v1697 = vsel %vm1695, %v1696, %v1694
    %v1698 = vrsqrt.pop %v1644
    %v1699 = vmul.f32 %v1644, %v1698
    %vm1700 = vcmp.eq.f32.partialorder %v1644, inf
    %v1701 = vsel %vm1700, %v1644, %v1699
    %vm1702 = vcmp.eq.f32.partialorder %v1644, 0.0
    %v1703 = vand.u32 %v1644, 2147483648
    %v1704 = vsel %vm1702, %v1703, %v1701
    %v1705 = vrsqrt.pop %v1645
    %v1706 = vmul.f32 %v1645, %v1705
    %vm1707 = vcmp.eq.f32.partialorder %v1645, inf
    %v1708 = vsel %vm1707, %v1645, %v1706
    %vm1709 = vcmp.eq.f32.partialorder %v1645, 0.0
    %v1710 = vand.u32 %v1645, 2147483648
    %v1711 = vsel %vm1709, %v1710, %v1708
    %v1712 = vrsqrt.pop %v1646
    %v1713 = vmul.f32 %v1646, %v1712
    %vm1714 = vcmp.eq.f32.partialorder %v1646, inf
    %v1715 = vsel %vm1714, %v1646, %v1713
    %vm1716 = vcmp.eq.f32.partialorder %v1646, 0.0
    %v1717 = vand.u32 %v1646, 2147483648
    %v1718 = vsel %vm1716, %v1717, %v1715
    %v1719 = vsub.f32 %v1669, 3.0
    %v1720 = vsub.f32 %v1676, 3.0
    %v1721 = vsub.f32 %v1683, 3.0
    %v1722 = vsub.f32 %v1690, 3.0
    %v1723 = vsub.f32 %v1697, 3.0
    %v1724 = vsub.f32 %v1704, 3.0
    %v1725 = vsub.f32 %v1711, 3.0
    %v1726 = vsub.f32 %v1718, 3.0
    %v1727 = vsel %vm1647, %v1655, %v1719
    %v1728 = vsel %vm1648, %v1656, %v1720
    %v1729 = vsel %vm1649, %v1657, %v1721
    %v1730 = vsel %vm1650, %v1658, %v1722
    %v1731 = vsel %vm1651, %v1659, %v1723
    %v1732 = vsel %vm1652, %v1660, %v1724
    %v1733 = vsel %vm1653, %v1661, %v1725
    %v1734 = vsel %vm1654, %v1662, %v1726
    %v1735 = vsel %vm1647, 3.9742602e-08, -0.00028314572
    %v1736 = vsel %vm1648, 3.9742602e-08, -0.00028314572
    %v1737 = vsel %vm1649, 3.9742602e-08, -0.00028314572
    %v1738 = vsel %vm1650, 3.9742602e-08, -0.00028314572
    %v1739 = vsel %vm1651, 3.9742602e-08, -0.00028314572
    %v1740 = vsel %vm1652, 3.9742602e-08, -0.00028314572
    %v1741 = vsel %vm1653, 3.9742602e-08, -0.00028314572
    %v1742 = vsel %vm1654, 3.9742602e-08, -0.00028314572
    %v1743 = vmul.f32 %v1735, %v1727
    %v1744 = vmul.f32 %v1736, %v1728
    %v1745 = vmul.f32 %v1737, %v1729
    %v1746 = vmul.f32 %v1738, %v1730
    %v1747 = vmul.f32 %v1739, %v1731
    %v1748 = vmul.f32 %v1740, %v1732
    %v1749 = vmul.f32 %v1741, %v1733
    %v1750 = vmul.f32 %v1742, %v1734
    %v1751 = vsel %vm1647, 4.8546264e-07, 0.00014276565
    %v1752 = vsel %vm1648, 4.8546264e-07, 0.00014276565
    %v1753 = vsel %vm1649, 4.8546264e-07, 0.00014276565
    %v1754 = vsel %vm1650, 4.8546264e-07, 0.00014276565
    %v1755 = vsel %vm1651, 4.8546264e-07, 0.00014276565
    %v1756 = vsel %vm1652, 4.8546264e-07, 0.00014276565
    %v1757 = vsel %vm1653, 4.8546264e-07, 0.00014276565
    %v1758 = vsel %vm1654, 4.8546264e-07, 0.00014276565
    %v1759 = vadd.f32 %v1743, %v1751
    %v1760 = vadd.f32 %v1744, %v1752
    %v1761 = vadd.f32 %v1745, %v1753
    %v1762 = vadd.f32 %v1746, %v1754
    %v1763 = vadd.f32 %v1747, %v1755
    %v1764 = vadd.f32 %v1748, %v1756
    %v1765 = vadd.f32 %v1749, %v1757
    %v1766 = vadd.f32 %v1750, %v1758
    %v1767 = vmul.f32 %v1759, %v1727
    %v1768 = vmul.f32 %v1760, %v1728
    %v1769 = vmul.f32 %v1761, %v1729
    %v1770 = vmul.f32 %v1762, %v1730
    %v1771 = vmul.f32 %v1763, %v1731
    %v1772 = vmul.f32 %v1764, %v1732
    %v1773 = vmul.f32 %v1765, %v1733
    %v1774 = vmul.f32 %v1766, %v1734
    %v1775 = vsel %vm1647, -4.9828227e-06, 0.0019082595
    %v1776 = vsel %vm1648, -4.9828227e-06, 0.0019082595
    %v1777 = vsel %vm1649, -4.9828227e-06, 0.0019082595
    %v1778 = vsel %vm1650, -4.9828227e-06, 0.0019082595
    %v1779 = vsel %vm1651, -4.9828227e-06, 0.0019082595
    %v1780 = vsel %vm1652, -4.9828227e-06, 0.0019082595
    %v1781 = vsel %vm1653, -4.9828227e-06, 0.0019082595
    %v1782 = vsel %vm1654, -4.9828227e-06, 0.0019082595
    %v1783 = vadd.f32 %v1767, %v1775
    %v1784 = vadd.f32 %v1768, %v1776
    %v1785 = vadd.f32 %v1769, %v1777
    %v1786 = vadd.f32 %v1770, %v1778
    %v1787 = vadd.f32 %v1771, %v1779
    %v1788 = vadd.f32 %v1772, %v1780
    %v1789 = vadd.f32 %v1773, %v1781
    %v1790 = vadd.f32 %v1774, %v1782
    %v1791 = vmul.f32 %v1783, %v1727
    %v1792 = vmul.f32 %v1784, %v1728
    %v1793 = vmul.f32 %v1785, %v1729
    %v1794 = vmul.f32 %v1786, %v1730
    %v1795 = vmul.f32 %v1787, %v1731
    %v1796 = vmul.f32 %v1788, %v1732
    %v1797 = vmul.f32 %v1789, %v1733
    %v1798 = vmul.f32 %v1790, %v1734
    %v1799 = vsel %vm1647, -6.210528e-06, -0.0051950123
    %v1800 = vsel %vm1648, -6.210528e-06, -0.0051950123
    %v1801 = vsel %vm1649, -6.210528e-06, -0.0051950123
    %v1802 = vsel %vm1650, -6.210528e-06, -0.0051950123
    %v1803 = vsel %vm1651, -6.210528e-06, -0.0051950123
    %v1804 = vsel %vm1652, -6.210528e-06, -0.0051950123
    %v1805 = vsel %vm1653, -6.210528e-06, -0.0051950123
    %v1806 = vsel %vm1654, -6.210528e-06, -0.0051950123
    %v1807 = vadd.f32 %v1791, %v1799
    %v1808 = vadd.f32 %v1792, %v1800
    %v1809 = vadd.f32 %v1793, %v1801
    %v1810 = vadd.f32 %v1794, %v1802
    %v1811 = vadd.f32 %v1795, %v1803
    %v1812 = vadd.f32 %v1796, %v1804
    %v1813 = vadd.f32 %v1797, %v1805
    %v1814 = vadd.f32 %v1798, %v1806
    %v1815 = vmul.f32 %v1807, %v1727
    %v1816 = vmul.f32 %v1808, %v1728
    %v1817 = vmul.f32 %v1809, %v1729
    %v1818 = vmul.f32 %v1810, %v1730
    %v1819 = vmul.f32 %v1811, %v1731
    %v1820 = vmul.f32 %v1812, %v1732
    %v1821 = vmul.f32 %v1813, %v1733
    %v1822 = vmul.f32 %v1814, %v1734
    %v1823 = vsel %vm1647, 0.00030912002, 0.00811689
    %v1824 = vsel %vm1648, 0.00030912002, 0.00811689
    %v1825 = vsel %vm1649, 0.00030912002, 0.00811689
    %v1826 = vsel %vm1650, 0.00030912002, 0.00811689
    %v1827 = vsel %vm1651, 0.00030912002, 0.00811689
    %v1828 = vsel %vm1652, 0.00030912002, 0.00811689
    %v1829 = vsel %vm1653, 0.00030912002, 0.00811689
    %v1830 = vsel %vm1654, 0.00030912002, 0.00811689
    %v1831 = vadd.f32 %v1815, %v1823
    %v1832 = vadd.f32 %v1816, %v1824
    %v1833 = vadd.f32 %v1817, %v1825
    %v1834 = vadd.f32 %v1818, %v1826
    %v1835 = vadd.f32 %v1819, %v1827
    %v1836 = vadd.f32 %v1820, %v1828
    %v1837 = vadd.f32 %v1821, %v1829
    %v1838 = vadd.f32 %v1822, %v1830
    %v1839 = vmul.f32 %v1831, %v1727
    %v1840 = vmul.f32 %v1832, %v1728
    %v1841 = vmul.f32 %v1833, %v1729
    %v1842 = vmul.f32 %v1834, %v1730
    %v1843 = vmul.f32 %v1835, %v1731
    %v1844 = vmul.f32 %v1836, %v1732
    %v1845 = vmul.f32 %v1837, %v1733
    %v1846 = vmul.f32 %v1838, %v1734
    %v1847 = vsel %vm1647, -0.0017730349, -0.010779788
    %v1848 = vsel %vm1648, -0.0017730349, -0.010779788
    %v1849 = vsel %vm1649, -0.0017730349, -0.010779788
    %v1850 = vsel %vm1650, -0.0017730349, -0.010779788
    %v1851 = vsel %vm1651, -0.0017730349, -0.010779788
    %v1852 = vsel %vm1652, -0.0017730349, -0.010779788
    %v1853 = vsel %vm1653, -0.0017730349, -0.010779788
    %v1854 = vsel %vm1654, -0.0017730349, -0.010779788
    %v1855 = vadd.f32 %v1839, %v1847
    %v1856 = vadd.f32 %v1840, %v1848
    %v1857 = vadd.f32 %v1841, %v1849
    %v1858 = vadd.f32 %v1842, %v1850
    %v1859 = vadd.f32 %v1843, %v1851
    %v1860 = vadd.f32 %v1844, %v1852
    %v1861 = vadd.f32 %v1845, %v1853
    %v1862 = vadd.f32 %v1846, %v1854
    %v1863 = vmul.f32 %v1855, %v1727
    %v1864 = vmul.f32 %v1856, %v1728
    %v1865 = vmul.f32 %v1857, %v1729
    %v1866 = vmul.f32 %v1858, %v1730
    %v1867 = vmul.f32 %v1859, %v1731
    %v1868 = vmul.f32 %v1860, %v1732
    %v1869 = vmul.f32 %v1861, %v1733
    %v1870 = vmul.f32 %v1862, %v1734
    %v1871 = vsel %vm1647, -0.005908134, 0.0133485785
    %v1872 = vsel %vm1648, -0.005908134, 0.0133485785
    %v1873 = vsel %vm1649, -0.005908134, 0.0133485785
    %v1874 = vsel %vm1650, -0.005908134, 0.0133485785
    %v1875 = vsel %vm1651, -0.005908134, 0.0133485785
    %v1876 = vsel %vm1652, -0.005908134, 0.0133485785
    %v1877 = vsel %vm1653, -0.005908134, 0.0133485785
    %v1878 = vsel %vm1654, -0.005908134, 0.0133485785
    %v1879 = vadd.f32 %v1863, %v1871
    %v1880 = vadd.f32 %v1864, %v1872
    %v1881 = vadd.f32 %v1865, %v1873
    %v1882 = vadd.f32 %v1866, %v1874
    %v1883 = vadd.f32 %v1867, %v1875
    %v1884 = vadd.f32 %v1868, %v1876
    %v1885 = vadd.f32 %v1869, %v1877
    %v1886 = vadd.f32 %v1870, %v1878
    %v1887 = vmul.f32 %v1879, %v1727
    %v1888 = vmul.f32 %v1880, %v1728
    %v1889 = vmul.f32 %v1881, %v1729
    %v1890 = vmul.f32 %v1882, %v1730
    %v1891 = vmul.f32 %v1883, %v1731
    %v1892 = vmul.f32 %v1884, %v1732
    %v1893 = vmul.f32 %v1885, %v1733
    %v1894 = vmul.f32 %v1886, %v1734
    %v1895 = vsel %vm1647, 0.34880266, 1.416581
    %v1896 = vsel %vm1648, 0.34880266, 1.416581
    %v1897 = vsel %vm1649, 0.34880266, 1.416581
    %v1898 = vsel %vm1650, 0.34880266, 1.416581
    %v1899 = vsel %vm1651, 0.34880266, 1.416581
    %v1900 = vsel %vm1652, 0.34880266, 1.416581
    %v1901 = vsel %vm1653, 0.34880266, 1.416581
    %v1902 = vsel %vm1654, 0.34880266, 1.416581
    %v1903 = vadd.f32 %v1887, %v1895
    %v1904 = vadd.f32 %v1888, %v1896
    %v1905 = vadd.f32 %v1889, %v1897
    %v1906 = vadd.f32 %v1890, %v1898
    %v1907 = vadd.f32 %v1891, %v1899
    %v1908 = vadd.f32 %v1892, %v1900
    %v1909 = vadd.f32 %v1893, %v1901
    %v1910 = vadd.f32 %v1894, %v1902
    %v1911 = vmul.f32 %v1903, %v1727
    %v1912 = vmul.f32 %v1904, %v1728
    %v1913 = vmul.f32 %v1905, %v1729
    %v1914 = vmul.f32 %v1906, %v1730
    %v1915 = vmul.f32 %v1907, %v1731
    %v1916 = vmul.f32 %v1908, %v1732
    %v1917 = vmul.f32 %v1909, %v1733
    %v1918 = vmul.f32 %v1910, %v1734
    %v1919 = vsel %vm1647, 2.1233137, 4.0064344
    %v1920 = vsel %vm1648, 2.1233137, 4.0064344
    %v1921 = vsel %vm1649, 2.1233137, 4.0064344
    %v1922 = vsel %vm1650, 2.1233137, 4.0064344
    %v1923 = vsel %vm1651, 2.1233137, 4.0064344
    %v1924 = vsel %vm1652, 2.1233137, 4.0064344
    %v1925 = vsel %vm1653, 2.1233137, 4.0064344
    %v1926 = vsel %vm1654, 2.1233137, 4.0064344
    %v1927 = vadd.f32 %v1911, %v1919
    %v1928 = vadd.f32 %v1912, %v1920
    %v1929 = vadd.f32 %v1913, %v1921
    %v1930 = vadd.f32 %v1914, %v1922
    %v1931 = vadd.f32 %v1915, %v1923
    %v1932 = vadd.f32 %v1916, %v1924
    %v1933 = vadd.f32 %v1917, %v1925
    %v1934 = vadd.f32 %v1918, %v1926
    %v1935 = vmul.f32 %v1927, %v1583
    %v1936 = vmul.f32 %v1928, %v1584
    %v1937 = vmul.f32 %v1929, %v1585
    %v1938 = vmul.f32 %v1930, %v1586
    %v1939 = vmul.f32 %v1931, %v1587
    %v1940 = vmul.f32 %v1932, %v1588
    %v1941 = vmul.f32 %v1933, %v1589
    %v1942 = vmul.f32 %v1934, %v1590
    %1943 = vst [vmem:[#allocation4 + $0xc0] sm:$0xff] %v1935
    %1944 = vst [vmem:[#allocation4 + $0xc8] sm:$0xff] %v1936
    %1945 = vst [vmem:[#allocation4 + $0xd0] sm:$0xff] %v1937
    %1946 = vst [vmem:[#allocation4 + $0xd8] sm:$0xff] %v1938
    %1947 = vst [vmem:[#allocation4 + $0xe0] sm:$0xff] %v1939
    %1948 = vst [vmem:[#allocation4 + $0xe8] sm:$0xff] %v1940
    %1949 = vst [vmem:[#allocation4 + $0xf0] sm:$0xff] %v1941
    %1950 = vst [vmem:[#allocation4 + $0xf8] sm:$0xff] %v1942
    // Predicated region
    $region2: #{tpu_custom_call.1} parent=1 // pred_check
      _
    $region3: #{tpu_custom_call.1} parent=1 // pred_check_branch
      %1952 = sbr.rel (0) target = $region5
    $region4: #{tpu_custom_call.1} parent=1 // pred_region
      %s1954 = ssub.s32 4096, 4096
      %1955 = vsyncadd [#allocation5], %s1954
      %s1956 = sshll.u32 [#allocation4], 4
      %s1957 = int_to_ptr.vmem [resolvable:$true] %s1956
      %1962 = dma.vmem_to_hbm [thread:$0]  %s1957, 4096, %s1, [#allocation5], 512, 512, 32
    $region5: #{tpu_custom_call.1} parent=1 // pred_fallthru
      _
    // Predicated region
    $region6: #{tpu_custom_call.1} parent=1 // pred_check
      _
    $region7: #{tpu_custom_call.1} parent=1 // pred_check_branch
      %1964 = sbr.rel (0) target = $region9
    $region8: #{tpu_custom_call.1} parent=1 // pred_region
      %1965 = dma.done [#allocation5], 4096
    $region9: #{tpu_custom_call.1} parent=1 // pred_fallthru
      _
    %1966 = vsyncpa [#allocation5], 1

</llo_original>
